<compile_context>
chip_gen: v7x
topology: tpu7x:2x2x1
jax: 0.10.0
libtpu: 0.0.40
codegen_flags: <defaults>
</compile_context>

<pallas_src>
import jax
import jax.numpy as jnp
import numpy as np
from jax.experimental import pallas as pl
from jax.experimental.pallas import tpu as pltpu


def _vq_kernel(z_ref, w_in_ref, b_in_ref, embed_ref, e2_ref, eprojT_ref, b_out_ref,
               zq_ref, idx_ref, ze_ref):
    # Per-step shapes (time tile Tt on lanes):
    #   z_ref:      [1, Din, Tt]   input slab, NCT orientation
    #   w_in_ref:   [Dcb, Din]     weight-normed 1x1 conv weight (in_project)
    #   b_in_ref:   [Dcb, 1]
    #   embed_ref:  [K, Dcb]       codebook
    #   e2_ref:     [K, 1]         ||e_k||^2        (precomputed in wrapper)
    #   eprojT_ref: [Din, K]       W_out @ embed.T  (precomputed in wrapper)
    #   b_out_ref:  [Din, 1]
    #   zq_ref:     [1, Din, Tt],  idx_ref: [1, 1, Tt] int32,  ze_ref: [1, Dcb, Tt]
    x = z_ref[0].astype(jnp.float32)                                          # [Din, Tt]

    # in_project: kernel_size=1 Conv1d == channel matmul (NCT orientation, no transposes)
    z_e = jnp.dot(w_in_ref[...], x, preferred_element_type=jnp.float32) + b_in_ref[...]
    ze_ref[0] = z_e.astype(ze_ref.dtype)                                      # [Dcb, Tt]

    # argmax_k -(||z_e||^2 - 2 z_e.e_k + ||e_k||^2) == argmax_k (2 z_e.e_k - ||e_k||^2)
    xe = jnp.dot(embed_ref[...], z_e, preferred_element_type=jnp.float32)     # [K, Tt] (MXU)
    score = 2.0 * xe - e2_ref[...]                                            # [K, Tt]

    k_size = score.shape[0]
    iota_k = jax.lax.broadcasted_iota(jnp.int32, score.shape, 0)
    maxv = jnp.max(score, axis=0, keepdims=True)                              # [1, Tt]
    # first maximal index (matches torch .max(dim=-1).indices / jnp.argmax semantics);
    # kept as max+where+min for robust Mosaic lowering of the cross-sublane reduction.
    idx = jnp.min(jnp.where(score == maxv, iota_k, k_size), axis=0, keepdims=True)
    idx_ref[0] = idx.astype(jnp.int32)                                        # [1, Tt]

    # one-hot gather fused with out_project:  out = W_out @ embed[idx] + b_out
    # (straight-through z_e + (q - z_e) == q numerically in the forward pass)
    onehot = (iota_k == idx).astype(jnp.float32)                              # [K, Tt]
    out = jnp.dot(eprojT_ref[...], onehot, preferred_element_type=jnp.float32) + b_out_ref[...]
    zq_ref[0] = out.astype(zq_ref.dtype)                                      # [Din, Tt]


def _weight_norm(v, g):
    # torch weight_norm with dim=0 on Conv1d weight [out, in, k]:
    #   w = g * v / ||v||_{dims (1,2)}   (per output channel)
    norm = jnp.sqrt(jnp.sum(v * v, axis=(1, 2), keepdims=True))
    return (g * v / norm)[..., 0]   # squeeze kernel_size=1 -> [out, in]


def init_params(key, input_dim, codebook_dim, codebook_size):
    k1, k2, k3, k4, k5, k6, k7 = jax.random.split(key, 7)
    v_in = jax.random.normal(k1, (codebook_dim, input_dim, 1), jnp.float32) * 0.1
    g_in = jax.random.uniform(k2, (codebook_dim, 1, 1), jnp.float32, 0.5, 1.5)
    b_in = jax.random.normal(k3, (codebook_dim,), jnp.float32) * 0.01
    v_out = jax.random.normal(k4, (input_dim, codebook_dim, 1), jnp.float32) * 0.1
    g_out = jax.random.uniform(k5, (input_dim, 1, 1), jnp.float32, 0.5, 1.5)
    b_out = jax.random.normal(k6, (input_dim,), jnp.float32) * 0.01
    embed = jax.random.normal(k7, (codebook_size, codebook_dim), jnp.float32)  # torch.randn init
    return dict(
        w_in=_weight_norm(v_in, g_in),    # [Dcb, Din]
        b_in=b_in,                        # [Dcb]
        w_out=_weight_norm(v_out, g_out),  # [Din, Dcb]
        b_out=b_out,                      # [Din]
        embed=embed,                      # [K, Dcb]
    )


def _round_up(x, m):
    return ((x + m - 1) // m) * m


def vector_quantize_forward(z, params, *, tile_t=512):
    """Eval-mode VectorQuantize.forward.

    z: [B, D_in, T] float32  ->  (z_q [B,D_in,T], commit_loss [B], codebook_loss [B],
                                  indices [B,T] int32, z_e [B,D_cb,T])
    """
    B, Din, T = z.shape
    w_in, b_in = params["w_in"], params["b_in"]
    w_out, b_out = params["w_out"], params["b_out"]
    embed = params["embed"]
    K, Dcb = embed.shape

    # Time tile on lanes: multiple of 128 (lane-dense, unmasked stores), capped by T.
    tile_t = max(128, (int(tile_t) // 128) * 128)
    tile_t = min(tile_t, _round_up(T, 128))
    T_pad = _round_up(T, tile_t)
    zp = jnp.pad(z, ((0, 0), (0, 0), (0, T_pad - T))) if T_pad != T else z

    # Hoisted, codebook-constant operands (computed once, outside the grid loop).
    f32 = jnp.float32
    w_in_f = w_in.astype(f32)                                        # [Dcb, Din]
    b_in_c = b_in.astype(f32).reshape(Dcb, 1)                        # [Dcb, 1]
    b_out_c = b_out.astype(f32).reshape(Din, 1)                      # [Din, 1]
    embed_f = embed.astype(f32)                                      # [K, Dcb]
    e2 = jnp.sum(embed_f * embed_f, axis=-1, keepdims=True)          # [K, 1]
    e_projT = jnp.dot(w_out.astype(f32), embed_f.T,                  # [Din, K] == (embed @ W_out.T).T
                      precision=jax.lax.Precision.HIGHEST)

    grid = (B, T_pad // tile_t)

    zq_p, idx_p, ze_p = pl.pallas_call(
        _vq_kernel,
        out_shape=(
            jax.ShapeDtypeStruct((B, Din, T_pad), jnp.float32),
            jax.ShapeDtypeStruct((B, 1, T_pad), jnp.int32),
            jax.ShapeDtypeStruct((B, Dcb, T_pad), jnp.float32),
        ),
        grid_spec=pltpu.PrefetchScalarGridSpec(
            num_scalar_prefetch=0,
            grid=grid,
            in_specs=[
                pl.BlockSpec((1, Din, tile_t), lambda b, t: (b, 0, t)),  # z slab (NCT)
                pl.BlockSpec((Dcb, Din), lambda b, t: (0, 0)),           # w_in
                pl.BlockSpec((Dcb, 1), lambda b, t: (0, 0)),             # b_in column
                pl.BlockSpec((K, Dcb), lambda b, t: (0, 0)),             # codebook
                pl.BlockSpec((K, 1), lambda b, t: (0, 0)),               # ||e||^2
                pl.BlockSpec((Din, K), lambda b, t: (0, 0)),             # W_out @ embed.T
                pl.BlockSpec((Din, 1), lambda b, t: (0, 0)),             # b_out column
            ],
            out_specs=[
                pl.BlockSpec((1, Din, tile_t), lambda b, t: (b, 0, t)),  # z_q (NCT)
                pl.BlockSpec((1, 1, tile_t), lambda b, t: (b, 0, t)),    # indices
                pl.BlockSpec((1, Dcb, tile_t), lambda b, t: (b, 0, t)),  # z_e (NCT)
            ],
        ),
        compiler_params=pltpu.CompilerParams(
            dimension_semantics=("parallel", "parallel"),
            vmem_limit_bytes=32 * 1024 * 1024,
        ),
    )(zp, w_in_f, b_in_c, embed_f, e2, e_projT, b_out_c)

    # Only strip the time padding — outputs are already in NCT orientation.
    z_q = zq_p[:, :, :T]
    indices = idx_p[:, 0, :T]
    z_e = ze_p[:, :, :T]

    # eval mode: zero losses (module.training == False branch)
    commit_loss = jnp.zeros((B,), jnp.float32)
    codebook_loss = jnp.zeros((B,), jnp.float32)
    return z_q, commit_loss, codebook_loss, indices, z_e


def _reference_forward(z, params):
    """Pure-JAX reference of the same eval-mode forward (torch-faithful formulation)."""
    hi = jax.lax.Precision.HIGHEST
    B, Din, T = z.shape
    x = jnp.transpose(z, (0, 2, 1)).reshape(B * T, Din)
    z_e = jnp.dot(x, params["w_in"].T, precision=hi) + params["b_in"][None, :]
    e = params["embed"]
    dist = -(jnp.sum(z_e**2, -1, keepdims=True)
             - 2.0 * jnp.dot(z_e, e.T, precision=hi)
             + jnp.sum(e**2, -1)[None, :])
    idx = jnp.argmax(dist, axis=-1).astype(jnp.int32)
    q = e[idx]
    z_q = z_e + (q - z_e)
    out = jnp.dot(z_q, params["w_out"].T, precision=hi) + params["b_out"][None, :]
    Dcb = e.shape[1]
    return (out.reshape(B, T, Din).transpose(0, 2, 1),
            idx.reshape(B, T),
            z_e.reshape(B, T, Dcb).transpose(0, 2, 1))


if __name__ == "__main__":
    B, Din, T = 2, 32, 16          # z: [B, D_in, T] — Conv1d (NCT) convention
    Dcb, K = 8, 256                # factorized VQ: codebook_dim=8, codebook_size=256

    key = jax.random.PRNGKey(0)
    kp, kz = jax.random.split(key)
    params = init_params(kp, Din, Dcb, K)
    z = jax.random.normal(kz, (B, Din, T), jnp.float32)

    z_q, commit_loss, codebook_loss, indices, z_e = jax.block_until_ready(
        vector_quantize_forward(z, params))

    # sanity check against pure-JAX reference
    zq_ref, idx_ref, ze_ref = _reference_forward(z, params)
    np.testing.assert_allclose(np.asarray(z_e), np.asarray(ze_ref), rtol=1e-5, atol=1e-5)
    np.testing.assert_array_equal(np.asarray(indices), np.asarray(idx_ref))
    np.testing.assert_allclose(np.asarray(z_q), np.asarray(zq_ref), rtol=1e-5, atol=1e-5)
    assert z_q.shape == (B, Din, T) and indices.shape == (B, T) and z_e.shape == (B, Dcb, T)
    assert commit_loss.shape == (B,) and codebook_loss.shape == (B,)

    print("KERNEL_OK")
</pallas_src>

<mosaic_0001>
module attributes {stable_mosaic.version = 11 : i64} {
  func.func @_vq_kernel(%arg0: i32, %arg1: i32, %arg2: memref<1x32x128xf32, #tpu.memory_space<vmem>>, %arg3: memref<8x32xf32, #tpu.memory_space<vmem>>, %arg4: memref<8x1xf32, #tpu.memory_space<vmem>>, %arg5: memref<256x8xf32, #tpu.memory_space<vmem>>, %arg6: memref<256x1xf32, #tpu.memory_space<vmem>>, %arg7: memref<32x256xf32, #tpu.memory_space<vmem>>, %arg8: memref<32x1xf32, #tpu.memory_space<vmem>>, %arg9: memref<1x32x128xf32, #tpu.memory_space<vmem>>, %arg10: memref<1x1x128xi32, #tpu.memory_space<vmem>>, %arg11: memref<1x8x128xf32, #tpu.memory_space<vmem>>) attributes {dimension_semantics = [#tpu.dimension_semantics<parallel>, #tpu.dimension_semantics<parallel>], iteration_bounds = array<i64: 2, 1>, scalar_prefetch = 0 : i64, scratch_operands = 0 : i64, tpu.core_type = #tpu.core_type<tc>, window_params = [{transform_indices = @transform_0, window_bounds = array<i64: 1, 32, 128>}, {pipeline_mode = #tpu.pipeline_mode<synchronous>, transform_indices = @transform_1, window_bounds = array<i64: 8, 32>}, {pipeline_mode = #tpu.pipeline_mode<synchronous>, transform_indices = @transform_2, window_bounds = array<i64: 8, 1>}, {pipeline_mode = #tpu.pipeline_mode<synchronous>, transform_indices = @transform_3, window_bounds = array<i64: 256, 8>}, {pipeline_mode = #tpu.pipeline_mode<synchronous>, transform_indices = @transform_4, window_bounds = array<i64: 256, 1>}, {pipeline_mode = #tpu.pipeline_mode<synchronous>, transform_indices = @transform_5, window_bounds = array<i64: 32, 256>}, {pipeline_mode = #tpu.pipeline_mode<synchronous>, transform_indices = @transform_6, window_bounds = array<i64: 32, 1>}, {transform_indices = @transform_7, window_bounds = array<i64: 1, 32, 128>}, {transform_indices = @transform_8, window_bounds = array<i64: 1, 1, 128>}, {transform_indices = @transform_9, window_bounds = array<i64: 1, 8, 128>}]} {
    %c0 = arith.constant 0 : index
    %c0_0 = arith.constant 0 : index
    %c0_1 = arith.constant 0 : index
    %0 = vector.load %arg2[%c0, %c0_0, %c0_1] : memref<1x32x128xf32, #tpu.memory_space<vmem>>, vector<1x32x128xf32>
    %1 = vector.shape_cast %0 : vector<1x32x128xf32> to vector<32x128xf32>
    %c0_2 = arith.constant 0 : index
    %c0_3 = arith.constant 0 : index
    %2 = vector.load %arg3[%c0_2, %c0_3] : memref<8x32xf32, #tpu.memory_space<vmem>>, vector<8x32xf32>
    %cst = arith.constant dense<0.000000e+00> : vector<8x128xf32>
    %3 = tpu.matmul %2, %1, %cst {dimension_numbers = #tpu.dot_dimension_numbers<[1], [0], [0], [1], [0, 0, 1, 1], [], []>} : vector<8x32xf32>, vector<32x128xf32>, vector<8x128xf32> -> vector<8x128xf32>
    %c0_4 = arith.constant 0 : index
    %c0_5 = arith.constant 0 : index
    %4 = vector.load %arg4[%c0_4, %c0_5] : memref<8x1xf32, #tpu.memory_space<vmem>>, vector<8x1xf32>
    %5 = vector.broadcast %4 : vector<8x1xf32> to vector<8x128xf32>
    %6 = arith.addf %3, %5 : vector<8x128xf32>
    %c0_6 = arith.constant 0 : index
    %c0_7 = arith.constant 0 : index
    %c0_8 = arith.constant 0 : index
    %7 = vector.load %arg11[%c0_6, %c0_7, %c0_8] : memref<1x8x128xf32, #tpu.memory_space<vmem>>, vector<1x8x128xf32>
    %8 = vector.shape_cast %7 : vector<1x8x128xf32> to vector<8x128xf32>
    %9 = vector.shape_cast %6 : vector<8x128xf32> to vector<1x8x128xf32>
    tpu.vector_store %arg11[%c0_6, %c0_7, %c0_8], %9 {strides = array<i32>} : memref<1x8x128xf32, #tpu.memory_space<vmem>>, vector<1x8x128xf32>,
    %c0_9 = arith.constant 0 : index
    %c0_10 = arith.constant 0 : index
    %10 = vector.load %arg5[%c0_9, %c0_10] : memref<256x8xf32, #tpu.memory_space<vmem>>, vector<256x8xf32>
    %cst_11 = arith.constant dense<0.000000e+00> : vector<256x128xf32>
    %11 = tpu.matmul %10, %6, %cst_11 {dimension_numbers = #tpu.dot_dimension_numbers<[1], [0], [0], [1], [0, 0, 1, 1], [], []>} : vector<256x8xf32>, vector<8x128xf32>, vector<256x128xf32> -> vector<256x128xf32>
    %cst_12 = arith.constant 2.000000e+00 : f32
    %12 = vector.broadcast %cst_12 : f32 to vector<256x128xf32>
    %13 = arith.mulf %12, %11 : vector<256x128xf32>
    %c0_13 = arith.constant 0 : index
    %c0_14 = arith.constant 0 : index
    %14 = vector.load %arg6[%c0_13, %c0_14] : memref<256x1xf32, #tpu.memory_space<vmem>>, vector<256x1xf32>
    %15 = vector.broadcast %14 : vector<256x1xf32> to vector<256x128xf32>
    %16 = arith.subf %13, %15 : vector<256x128xf32>
    %17 = tpu.iota {dimensions = array<i32: 0>} : vector<256x128xi32>
    %cst_15 = arith.constant dense<0xFF800000> : vector<128xf32>
    %18 = vector.multi_reduction <maximumf>, %16, %cst_15 [0] : vector<256x128xf32> to vector<128xf32>
    %19 = vector.shape_cast %18 : vector<128xf32> to vector<1x128xf32>
    %20 = vector.broadcast %19 : vector<1x128xf32> to vector<256x128xf32>
    %21 = arith.cmpf oeq, %16, %20 : vector<256x128xf32>
    %c256_i32 = arith.constant 256 : i32
    %22 = vector.broadcast %c256_i32 : i32 to vector<256x128xi32>
    %23 = arith.select %21, %17, %22 : vector<256x128xi1>, vector<256x128xi32>
    %cst_16 = arith.constant dense<2147483647> : vector<128xi32>
    %24 = vector.multi_reduction <minsi>, %23, %cst_16 [0] : vector<256x128xi32> to vector<128xi32>
    %25 = vector.shape_cast %24 : vector<128xi32> to vector<1x128xi32>
    %c0_17 = arith.constant 0 : index
    %c0_18 = arith.constant 0 : index
    %c0_19 = arith.constant 0 : index
    %26 = vector.load %arg10[%c0_17, %c0_18, %c0_19] : memref<1x1x128xi32, #tpu.memory_space<vmem>>, vector<1x1x128xi32>
    %27 = vector.shape_cast %26 : vector<1x1x128xi32> to vector<1x128xi32>
    %28 = vector.shape_cast %25 : vector<1x128xi32> to vector<1x1x128xi32>
    tpu.vector_store %arg10[%c0_17, %c0_18, %c0_19], %28 {strides = array<i32>} : memref<1x1x128xi32, #tpu.memory_space<vmem>>, vector<1x1x128xi32>,
    %29 = vector.broadcast %25 : vector<1x128xi32> to vector<256x128xi32>
    %30 = arith.cmpi eq, %17, %29 : vector<256x128xi32>
    %31 = arith.extui %30 : vector<256x128xi1> to vector<256x128xi32>
    %32 = arith.sitofp %31 : vector<256x128xi32> to vector<256x128xf32>
    %c0_20 = arith.constant 0 : index
    %c0_21 = arith.constant 0 : index
    %33 = vector.load %arg7[%c0_20, %c0_21] : memref<32x256xf32, #tpu.memory_space<vmem>>, vector<32x256xf32>
    %cst_22 = arith.constant dense<0.000000e+00> : vector<32x128xf32>
    %34 = tpu.matmul %33, %32, %cst_22 {dimension_numbers = #tpu.dot_dimension_numbers<[1], [0], [0], [1], [0, 0, 1, 1], [], []>} : vector<32x256xf32>, vector<256x128xf32>, vector<32x128xf32> -> vector<32x128xf32>
    %c0_23 = arith.constant 0 : index
    %c0_24 = arith.constant 0 : index
    %35 = vector.load %arg8[%c0_23, %c0_24] : memref<32x1xf32, #tpu.memory_space<vmem>>, vector<32x1xf32>
    %36 = vector.broadcast %35 : vector<32x1xf32> to vector<32x128xf32>
    %37 = arith.addf %34, %36 : vector<32x128xf32>
    %c0_25 = arith.constant 0 : index
    %c0_26 = arith.constant 0 : index
    %c0_27 = arith.constant 0 : index
    %38 = vector.load %arg9[%c0_25, %c0_26, %c0_27] : memref<1x32x128xf32, #tpu.memory_space<vmem>>, vector<1x32x128xf32>
    %39 = vector.shape_cast %38 : vector<1x32x128xf32> to vector<32x128xf32>
    %40 = vector.shape_cast %37 : vector<32x128xf32> to vector<1x32x128xf32>
    tpu.vector_store %arg9[%c0_25, %c0_26, %c0_27], %40 {strides = array<i32>} : memref<1x32x128xf32, #tpu.memory_space<vmem>>, vector<1x32x128xf32>,
    return
  }
  func.func @transform_0(%arg0: i32, %arg1: i32) -> (i32, i32, i32) {
    %c0_i32 = arith.constant 0 : i32
    %c0_i32_0 = arith.constant 0 : i32
    return %arg0, %c0_i32, %arg1 : i32, i32, i32
  }
  func.func @transform_1(%arg0: i32, %arg1: i32) -> (i32, i32) {
    %c0_i32 = arith.constant 0 : i32
    %c0_i32_0 = arith.constant 0 : i32
    %c0_i32_1 = arith.constant 0 : i32
    return %c0_i32, %c0_i32_0 : i32, i32
  }
  func.func @transform_2(%arg0: i32, %arg1: i32) -> (i32, i32) {
    %c0_i32 = arith.constant 0 : i32
    %c0_i32_0 = arith.constant 0 : i32
    %c0_i32_1 = arith.constant 0 : i32
    return %c0_i32, %c0_i32_0 : i32, i32
  }
  func.func @transform_3(%arg0: i32, %arg1: i32) -> (i32, i32) {
    %c0_i32 = arith.constant 0 : i32
    %c0_i32_0 = arith.constant 0 : i32
    %c0_i32_1 = arith.constant 0 : i32
    return %c0_i32, %c0_i32_0 : i32, i32
  }
  func.func @transform_4(%arg0: i32, %arg1: i32) -> (i32, i32) {
    %c0_i32 = arith.constant 0 : i32
    %c0_i32_0 = arith.constant 0 : i32
    %c0_i32_1 = arith.constant 0 : i32
    return %c0_i32, %c0_i32_0 : i32, i32
  }
  func.func @transform_5(%arg0: i32, %arg1: i32) -> (i32, i32) {
    %c0_i32 = arith.constant 0 : i32
    %c0_i32_0 = arith.constant 0 : i32
    %c0_i32_1 = arith.constant 0 : i32
    return %c0_i32, %c0_i32_0 : i32, i32
  }
  func.func @transform_6(%arg0: i32, %arg1: i32) -> (i32, i32) {
    %c0_i32 = arith.constant 0 : i32
    %c0_i32_0 = arith.constant 0 : i32
    %c0_i32_1 = arith.constant 0 : i32
    return %c0_i32, %c0_i32_0 : i32, i32
  }
  func.func @transform_7(%arg0: i32, %arg1: i32) -> (i32, i32, i32) {
    %c0_i32 = arith.constant 0 : i32
    %c0_i32_0 = arith.constant 0 : i32
    return %arg0, %c0_i32, %arg1 : i32, i32, i32
  }
  func.func @transform_8(%arg0: i32, %arg1: i32) -> (i32, i32, i32) {
    %c0_i32 = arith.constant 0 : i32
    %c0_i32_0 = arith.constant 0 : i32
    return %arg0, %c0_i32, %arg1 : i32, i32, i32
  }
  func.func @transform_9(%arg0: i32, %arg1: i32) -> (i32, i32, i32) {
    %c0_i32 = arith.constant 0 : i32
    %c0_i32_0 = arith.constant 0 : i32
    return %arg0, %c0_i32, %arg1 : i32, i32, i32
  }
}

</mosaic_0001>

<llo_original>
// kernel: tpu_custom_call.1
$region0: #{tpu_custom_call.1}
  #allocation0 [shape = 'u32[]', space=smem, size = 0x4, offset = 0x4, fixed_abs, tag = 'smem constant byte address 0x4 - core index']
  #allocation1 [shape = 'u32[144,128]{1,0:T(1,128)}', space=vmem, size = 0x12000, scoped, tag = 'internal scratch']
  %s0 = inlined_call_operand.vmem [shape: f32[2,32,128], index: 0, kind: input, shape index: {}]
  %s1 = inlined_call_operand.vmem [shape: f32[8,32], index: 1, kind: input, shape index: {}]
  %s2 = inlined_call_operand.vmem [shape: f32[8,1], index: 2, kind: input, shape index: {}]
  %s3 = inlined_call_operand.vmem [shape: f32[256,8], index: 3, kind: input, shape index: {}]
  %s4 = inlined_call_operand.vmem [shape: f32[256,1], index: 4, kind: input, shape index: {}]
  %s5 = inlined_call_operand.vmem [shape: f32[32,256], index: 5, kind: input, shape index: {}]
  %s6 = inlined_call_operand.vmem [shape: f32[32,1], index: 6, kind: input, shape index: {}]
  %s7 = inlined_call_operand.hbm [shape: f32[2,32,128], index: 7, kind: output, shape index: {0}]
  %s8 = inlined_call_operand.hbm [shape: s32[2,1,128], index: 8, kind: output, shape index: {1}]
  %s9 = inlined_call_operand.hbm [shape: f32[2,8,128], index: 9, kind: output, shape index: {2}]
  %10 = xla_tuple %s7, %s8, %s9
  %s11 = sld [smem:[#allocation0]]
  $region77: #{tpu_custom_call.1} parent=0
    _
  %s13 = ssub.s32 1, %s11
  %s14 = scalar_select 0, %s13, %s11
  $region1: #{tpu_custom_call.1} parent=0
    #allocation2 [shape = 'u8[32768]{0}', space=vmem, size = 0x8000, scoped, tag = 'output window, operand 0']
    #allocation3 [shape = 's32[2]{0}', space=sflag, size = 0x8, scoped, tag = 'scoped memory for tpu_custom_call.1']
    #allocation4 [shape = 'u8[1024]{0}', space=vmem, size = 0x400, scoped, tag = 'output window, operand 1']
    #allocation5 [shape = 's32[2]{0}', space=sflag, size = 0x8, scoped, tag = 'scoped memory for tpu_custom_call.1']
    #allocation6 [shape = 'u8[8192]{0}', space=vmem, size = 0x2000, scoped, tag = 'output window, operand 2']
    %15 = vsyncpa [#allocation3], 0
    %s16 = scalar_lea.sflag [#allocation3], 1
    %17 = vsyncpa %s16, 0
    %18 = vsyncpa [#allocation5], 0
    %s19 = scalar_lea.sflag [#allocation5], 1
    %20 = vsyncpa %s19, 0
    loop: start=0, step=1, limit=4
    $region2: #{tpu_custom_call.1} parent=1 // loop_pre_header
      _
    $region3: #{tpu_custom_call.1} parent=1 // loop_header
      %s22 = sphi 0, %s26
      %p23 = scmp.ge.s32.totalorder %s22, 4
      %s29 = sphi 0, %s41
      %s30 = sphi 0, %s37
      %s31 = sphi 0, %s29
      %s32 = sphi 0, %s30
      %s33 = sphi 0, %s31
      %s34 = sphi 0, %s32
      %s46 = sphi 0, %s48
      %s49 = sphi 0, %s46
      %s50 = sphi 0, %s49
      %s66 = sphi 0, %s50
      %s70 = sphi 0, %s70
      %s72 = sphi 0, %s70
      %s73 = sphi 0, %s72
      %s87 = sphi 0, %s73
      %s91 = sphi 0, %s91
      %s93 = sphi 0, %s91
      %s94 = sphi 0, %s93
      %s108 = sphi 0, %s94
      %s112 = sphi 0, %s112
      %s114 = sphi 0, %s112
      %s115 = sphi 0, %s114
      %s129 = sphi 0, %s115
      %s133 = sphi 0, %s133
      %s135 = sphi 0, %s133
      %s136 = sphi 0, %s135
      %s150 = sphi 0, %s136
      %s154 = sphi 0, %s154
      %s156 = sphi 0, %s154
      %s157 = sphi 0, %s156
      %s171 = sphi 0, %s157
      %s175 = sphi 0, %s175
      %s177 = sphi 0, %s175
      %s178 = sphi 0, %s177
      %s192 = sphi 0, %s178
      %s200 = sphi 0, %s202
      %s203 = sphi 0, %s200
      %s204 = sphi 0, %s203
      %s220 = sphi 0, %s204
      %s228 = sphi 0, %s230
      %s231 = sphi 0, %s228
      %s232 = sphi 0, %s231
      %s248 = sphi 0, %s232
      %s256 = sphi 0, %s258
      %s259 = sphi 0, %s256
      %s260 = sphi 0, %s259
      %s276 = sphi 0, %s260
    $region4: #{tpu_custom_call.1} parent=1 // loop_header_branch
      %25 = sbr.rel (%p23) target = $region8
    $region5: #{tpu_custom_call.1} parent=1 // loop_body
      %s27 = ssub.s32 %s22, 1
      %s28 = ssub.s32 %s22, 2
      %s35 = sadd.s32 1, %s30
      %p36 = scmp.ge.s32.totalorder %s35, 1
      %s37 = scalar_select %p36, 0, %s35
      %s38 = sadd.s32 1, %s29
      %s39 = scalar_select %p36, %s38, %s29
      %p40 = scmp.ge.s32.totalorder %s39, 2
      %s41 = scalar_select %p40, 0, %s39
      %s42 = ssub.s32 %s29, %s41
      %s43 = ssub.s32 %s30, %s37
      %s44 = sor.u32 %s42, %s43
      %p45 = scmp.eq.s32.totalorder %s44, 0
      %s47 = sadd.s32 %s46, 1
      %s48 = scalar_select %p45, %s46, %s47
      %p51 = pneg %p45
      %p52 = scmp.eq.s32.totalorder %s22, 1
      %p53 = por %p51, %p52
      %p54 = scmp.ne.s32.totalorder %s46, %s49
      %p55 = scmp.eq.s32.totalorder %s22, 0
      %p56 = por %p54, %p55
      %p57 = scmp.ne.s32.totalorder %s46, %s49
      %p58 = scmp.eq.s32.totalorder %s27, 1
      %p59 = por %p57, %p58
      %p60 = scmp.ne.s32.totalorder %s49, %s50
      %p61 = scmp.eq.s32.totalorder %s27, 0
      %p62 = por %p60, %p61
      %p63 = scmp.ne.s32.totalorder %s49, %s50
      %p64 = scmp.eq.s32.totalorder %s28, 1
      %p65 = por %p63, %p64
      %p67 = scmp.ne.s32.totalorder %s50, %s66
      %p68 = scmp.eq.s32.totalorder %s28, 0
      %p69 = por %p67, %p68
      %s71 = sadd.s32 %s70, 1
      %p74 = scmp.eq.s32.totalorder %s22, 1
      %p75 = scmp.ne.s32.totalorder %s70, %s72
      %p76 = scmp.eq.s32.totalorder %s22, 0
      %p77 = por %p75, %p76
      %p78 = scmp.ne.s32.totalorder %s70, %s72
      %p79 = scmp.eq.s32.totalorder %s27, 1
      %p80 = por %p78, %p79
      %p81 = scmp.ne.s32.totalorder %s72, %s73
      %p82 = scmp.eq.s32.totalorder %s27, 0
      %p83 = por %p81, %p82
      %p84 = scmp.ne.s32.totalorder %s72, %s73
      %p85 = scmp.eq.s32.totalorder %s28, 1
      %p86 = por %p84, %p85
      %p88 = scmp.ne.s32.totalorder %s73, %s87
      %p89 = scmp.eq.s32.totalorder %s28, 0
      %p90 = por %p88, %p89
      %s92 = sadd.s32 %s91, 1
      %p95 = scmp.eq.s32.totalorder %s22, 1
      %p96 = scmp.ne.s32.totalorder %s91, %s93
      %p97 = scmp.eq.s32.totalorder %s22, 0
      %p98 = por %p96, %p97
      %p99 = scmp.ne.s32.totalorder %s91, %s93
      %p100 = scmp.eq.s32.totalorder %s27, 1
      %p101 = por %p99, %p100
      %p102 = scmp.ne.s32.totalorder %s93, %s94
      %p103 = scmp.eq.s32.totalorder %s27, 0
      %p104 = por %p102, %p103
      %p105 = scmp.ne.s32.totalorder %s93, %s94
      %p106 = scmp.eq.s32.totalorder %s28, 1
      %p107 = por %p105, %p106
      %p109 = scmp.ne.s32.totalorder %s94, %s108
      %p110 = scmp.eq.s32.totalorder %s28, 0
      %p111 = por %p109, %p110
      %s113 = sadd.s32 %s112, 1
      %p116 = scmp.eq.s32.totalorder %s22, 1
      %p117 = scmp.ne.s32.totalorder %s112, %s114
      %p118 = scmp.eq.s32.totalorder %s22, 0
      %p119 = por %p117, %p118
      %p120 = scmp.ne.s32.totalorder %s112, %s114
      %p121 = scmp.eq.s32.totalorder %s27, 1
      %p122 = por %p120, %p121
      %p123 = scmp.ne.s32.totalorder %s114, %s115
      %p124 = scmp.eq.s32.totalorder %s27, 0
      %p125 = por %p123, %p124
      %p126 = scmp.ne.s32.totalorder %s114, %s115
      %p127 = scmp.eq.s32.totalorder %s28, 1
      %p128 = por %p126, %p127
      %p130 = scmp.ne.s32.totalorder %s115, %s129
      %p131 = scmp.eq.s32.totalorder %s28, 0
      %p132 = por %p130, %p131
      %s134 = sadd.s32 %s133, 1
      %p137 = scmp.eq.s32.totalorder %s22, 1
      %p138 = scmp.ne.s32.totalorder %s133, %s135
      %p139 = scmp.eq.s32.totalorder %s22, 0
      %p140 = por %p138, %p139
      %p141 = scmp.ne.s32.totalorder %s133, %s135
      %p142 = scmp.eq.s32.totalorder %s27, 1
      %p143 = por %p141, %p142
      %p144 = scmp.ne.s32.totalorder %s135, %s136
      %p145 = scmp.eq.s32.totalorder %s27, 0
      %p146 = por %p144, %p145
      %p147 = scmp.ne.s32.totalorder %s135, %s136
      %p148 = scmp.eq.s32.totalorder %s28, 1
      %p149 = por %p147, %p148
      %p151 = scmp.ne.s32.totalorder %s136, %s150
      %p152 = scmp.eq.s32.totalorder %s28, 0
      %p153 = por %p151, %p152
      %s155 = sadd.s32 %s154, 1
      %p158 = scmp.eq.s32.totalorder %s22, 1
      %p159 = scmp.ne.s32.totalorder %s154, %s156
      %p160 = scmp.eq.s32.totalorder %s22, 0
      %p161 = por %p159, %p160
      %p162 = scmp.ne.s32.totalorder %s154, %s156
      %p163 = scmp.eq.s32.totalorder %s27, 1
      %p164 = por %p162, %p163
      %p165 = scmp.ne.s32.totalorder %s156, %s157
      %p166 = scmp.eq.s32.totalorder %s27, 0
      %p167 = por %p165, %p166
      %p168 = scmp.ne.s32.totalorder %s156, %s157
      %p169 = scmp.eq.s32.totalorder %s28, 1
      %p170 = por %p168, %p169
      %p172 = scmp.ne.s32.totalorder %s157, %s171
      %p173 = scmp.eq.s32.totalorder %s28, 0
      %p174 = por %p172, %p173
      %s176 = sadd.s32 %s175, 1
      %p179 = scmp.eq.s32.totalorder %s22, 1
      %p180 = scmp.ne.s32.totalorder %s175, %s177
      %p181 = scmp.eq.s32.totalorder %s22, 0
      %p182 = por %p180, %p181
      %p183 = scmp.ne.s32.totalorder %s175, %s177
      %p184 = scmp.eq.s32.totalorder %s27, 1
      %p185 = por %p183, %p184
      %p186 = scmp.ne.s32.totalorder %s177, %s178
      %p187 = scmp.eq.s32.totalorder %s27, 0
      %p188 = por %p186, %p187
      %p189 = scmp.ne.s32.totalorder %s177, %s178
      %p190 = scmp.eq.s32.totalorder %s28, 1
      %p191 = por %p189, %p190
      %p193 = scmp.ne.s32.totalorder %s178, %s192
      %p194 = scmp.eq.s32.totalorder %s28, 0
      %p195 = por %p193, %p194
      %s196 = ssub.s32 %s29, %s41
      %s197 = ssub.s32 %s30, %s37
      %s198 = sor.u32 %s196, %s197
      %p199 = scmp.eq.s32.totalorder %s198, 0
      %s201 = sadd.s32 %s200, 1
      %s202 = scalar_select %p199, %s200, %s201
      %p205 = pneg %p199
      %p206 = scmp.eq.s32.totalorder %s22, 1
      %p207 = por %p205, %p206
      %p208 = scmp.ne.s32.totalorder %s200, %s203
      %p209 = scmp.eq.s32.totalorder %s22, 0
      %p210 = por %p208, %p209
      %p211 = scmp.ne.s32.totalorder %s200, %s203
      %p212 = scmp.eq.s32.totalorder %s27, 1
      %p213 = por %p211, %p212
      %p214 = scmp.ne.s32.totalorder %s203, %s204
      %p215 = scmp.eq.s32.totalorder %s27, 0
      %p216 = por %p214, %p215
      %p217 = scmp.ne.s32.totalorder %s203, %s204
      %p218 = scmp.eq.s32.totalorder %s28, 1
      %p219 = por %p217, %p218
      %p221 = scmp.ne.s32.totalorder %s204, %s220
      %p222 = scmp.eq.s32.totalorder %s28, 0
      %p223 = por %p221, %p222
      %s224 = ssub.s32 %s29, %s41
      %s225 = ssub.s32 %s30, %s37
      %s226 = sor.u32 %s224, %s225
      %p227 = scmp.eq.s32.totalorder %s226, 0
      %s229 = sadd.s32 %s228, 1
      %s230 = scalar_select %p227, %s228, %s229
      %p233 = pneg %p227
      %p234 = scmp.eq.s32.totalorder %s22, 1
      %p235 = por %p233, %p234
      %p236 = scmp.ne.s32.totalorder %s228, %s231
      %p237 = scmp.eq.s32.totalorder %s22, 0
      %p238 = por %p236, %p237
      %p239 = scmp.ne.s32.totalorder %s228, %s231
      %p240 = scmp.eq.s32.totalorder %s27, 1
      %p241 = por %p239, %p240
      %p242 = scmp.ne.s32.totalorder %s231, %s232
      %p243 = scmp.eq.s32.totalorder %s27, 0
      %p244 = por %p242, %p243
      %p245 = scmp.ne.s32.totalorder %s231, %s232
      %p246 = scmp.eq.s32.totalorder %s28, 1
      %p247 = por %p245, %p246
      %p249 = scmp.ne.s32.totalorder %s232, %s248
      %p250 = scmp.eq.s32.totalorder %s28, 0
      %p251 = por %p249, %p250
      %s252 = ssub.s32 %s29, %s41
      %s253 = ssub.s32 %s30, %s37
      %s254 = sor.u32 %s252, %s253
      %p255 = scmp.eq.s32.totalorder %s254, 0
      %s257 = sadd.s32 %s256, 1
      %s258 = scalar_select %p255, %s256, %s257
      %p261 = pneg %p255
      %p262 = scmp.eq.s32.totalorder %s22, 1
      %p263 = por %p261, %p262
      %p264 = scmp.ne.s32.totalorder %s256, %s259
      %p265 = scmp.eq.s32.totalorder %s22, 0
      %p266 = por %p264, %p265
      %p267 = scmp.ne.s32.totalorder %s256, %s259
      %p268 = scmp.eq.s32.totalorder %s27, 1
      %p269 = por %p267, %p268
      %p270 = scmp.ne.s32.totalorder %s259, %s260
      %p271 = scmp.eq.s32.totalorder %s27, 0
      %p272 = por %p270, %p271
      %p273 = scmp.ne.s32.totalorder %s259, %s260
      %p274 = scmp.eq.s32.totalorder %s28, 1
      %p275 = por %p273, %p274
      %p277 = scmp.ne.s32.totalorder %s260, %s276
      %p278 = scmp.eq.s32.totalorder %s28, 0
      %p279 = por %p277, %p278
      %p280 = scmp.le.s32.totalorder 1, %s22
      %p281 = scmp.lt.s32.totalorder %s22, 3
      %p282 = pnand %p280, %p281
      %p283 = pneg %p282
      // Predicated region
      $region9: #{tpu_custom_call.1} parent=5 // pred_check
        _
      $region10: #{tpu_custom_call.1} parent=5 // pred_check_branch
        %285 = sbr.rel (%p282) target = $region12
      $region11: #{tpu_custom_call.1} parent=5 // pred_region
        %s286 = ssub.s32 %s22, 1
        // Predicated region
        $region13: #{tpu_custom_call.1} parent=11 // pred_check
          %p287 = pneg %p83
        $region14: #{tpu_custom_call.1} parent=11 // pred_check_branch
          %289 = sbr.rel (%p287) target = $region16
        $region15: #{tpu_custom_call.1} parent=11 // pred_region
          _
        $region16: #{tpu_custom_call.1} parent=11 // pred_fallthru
          _
        // Predicated region
        $region17: #{tpu_custom_call.1} parent=11 // pred_check
          %p290 = pneg %p104
        $region18: #{tpu_custom_call.1} parent=11 // pred_check_branch
          %292 = sbr.rel (%p290) target = $region20
        $region19: #{tpu_custom_call.1} parent=11 // pred_region
          _
        $region20: #{tpu_custom_call.1} parent=11 // pred_fallthru
          _
        // Predicated region
        $region21: #{tpu_custom_call.1} parent=11 // pred_check
          %p293 = pneg %p125
        $region22: #{tpu_custom_call.1} parent=11 // pred_check_branch
          %295 = sbr.rel (%p293) target = $region24
        $region23: #{tpu_custom_call.1} parent=11 // pred_region
          _
        $region24: #{tpu_custom_call.1} parent=11 // pred_fallthru
          _
        // Predicated region
        $region25: #{tpu_custom_call.1} parent=11 // pred_check
          %p296 = pneg %p146
        $region26: #{tpu_custom_call.1} parent=11 // pred_check_branch
          %298 = sbr.rel (%p296) target = $region28
        $region27: #{tpu_custom_call.1} parent=11 // pred_region
          _
        $region28: #{tpu_custom_call.1} parent=11 // pred_fallthru
          _
        // Predicated region
        $region29: #{tpu_custom_call.1} parent=11 // pred_check
          %p299 = pneg %p167
        $region30: #{tpu_custom_call.1} parent=11 // pred_check_branch
          %301 = sbr.rel (%p299) target = $region32
        $region31: #{tpu_custom_call.1} parent=11 // pred_region
          _
        $region32: #{tpu_custom_call.1} parent=11 // pred_fallthru
          _
        // Predicated region
        $region33: #{tpu_custom_call.1} parent=11 // pred_check
          %p302 = pneg %p188
        $region34: #{tpu_custom_call.1} parent=11 // pred_check_branch
          %304 = sbr.rel (%p302) target = $region36
        $region35: #{tpu_custom_call.1} parent=11 // pred_region
          _
        $region36: #{tpu_custom_call.1} parent=11 // pred_fallthru
          _
      $region12: #{tpu_custom_call.1} parent=5 // pred_fallthru
        _
      %p305 = scmp.lt.s32.totalorder %s22, 2
      // Predicated region
      $region37: #{tpu_custom_call.1} parent=5 // pred_check
        %p306 = pneg %p305
      $region38: #{tpu_custom_call.1} parent=5 // pred_check_branch
        %308 = sbr.rel (%p306) target = $region40
      $region39: #{tpu_custom_call.1} parent=5 // pred_region
        // Predicated region
        $region41: #{tpu_custom_call.1} parent=39 // pred_check
          %p309 = pneg %p56
        $region42: #{tpu_custom_call.1} parent=39 // pred_check_branch
          %311 = sbr.rel (%p309) target = $region44
        $region43: #{tpu_custom_call.1} parent=39 // pred_region
          %p312 = scmp.lt.s32.totalorder %s29, 1
          %s313 = scalar_select %p312, %s29, 1
          %p314 = scmp.lt.s32.totalorder %s30, 0
          %s315 = scalar_select %p314, %s30, 0
          %s316 = smul.addr %s313, 4
          %s317 = sadd.s32 %s315, %s316
          %s318 = smul.addr %s317, 8
          %s319 = scalar_lea.vmem %s0, %s318
        $region44: #{tpu_custom_call.1} parent=39 // pred_fallthru
          _
      $region40: #{tpu_custom_call.1} parent=5 // pred_fallthru
        _
      %p320 = scmp.le.s32.totalorder 1, %s22
      %p321 = scmp.lt.s32.totalorder %s22, 3
      %p322 = pnand %p320, %p321
      %p323 = pneg %p322
      // Predicated region
      $region45: #{tpu_custom_call.1} parent=5 // pred_check
        _
      $region46: #{tpu_custom_call.1} parent=5 // pred_check_branch
        %325 = sbr.rel (%p322) target = $region48
      $region47: #{tpu_custom_call.1} parent=5 // pred_region
        %s326 = ssub.s32 %s22, 1
        %p327 = scmp.lt.s32.totalorder %s31, 1
        %s328 = scalar_select %p327, %s31, 1
        %p329 = scmp.lt.s32.totalorder %s32, 0
        %s330 = scalar_select %p329, %s32, 0
        %s331 = smul.addr %s328, 4
        %s332 = sadd.s32 %s330, %s331
        %s333 = smul.addr %s332, 8
        %s334 = scalar_lea.vmem %s0, %s333
        %p335 = pneg %p62
        %p336 = pneg %p59
        %p337 = pneg %p83
        %p338 = pneg %p80
        %p339 = pneg %p104
        %p340 = pneg %p101
        %p341 = pneg %p125
        %p342 = pneg %p122
        %p343 = pneg %p146
        %p344 = pneg %p143
        %p345 = pneg %p167
        %p346 = pneg %p164
        %p347 = pneg %p188
        %p348 = pneg %p185
        %p349 = pneg %p216
        %p350 = pneg %p213
        %s351 = sand.u32 %s203, 1
        %s352 = scalar_lea.sflag [#allocation3], %s351
        %s353 = sand.u32 %s203, 1
        %s354 = smul.addr %s353, 32
        %s355 = scalar_lea.vmem [#allocation2], %s354
        %p356 = pneg %p244
        %p357 = pneg %p241
        %s358 = sand.u32 %s27, 1
        %s359 = scalar_lea.sflag [#allocation5], %s358
        %s360 = sand.u32 %s231, 1
        %s361 = scalar_lea.vmem [#allocation4], %s360
        %p362 = pneg %p272
        %p363 = pneg %p269
        %s364 = sand.u32 %s27, 1
        %s365 = scalar_lea.sflag [#allocation5], %s364
        %s366 = sand.u32 %s259, 1
        %s367 = smul.addr %s366, 8
        %s368 = scalar_lea.vmem [#allocation6], %s367
        %p369 = scmp.lt.s32.totalorder %s31, 1
        %s370 = scalar_select %p369, %s31, 1
        %p371 = scmp.lt.s32.totalorder %s32, 0
        %s372 = scalar_select %p371, %s32, 0
        %s373 = smul.addr %s370, 4
        %s374 = sadd.s32 %s372, %s373
        %s375 = smul.addr %s374, 8
        %s376 = scalar_lea.vmem %s0, %s375
        %v377 = vld [vmem:[%s376] sm:$0xff]
        %v378 = vld [vmem:[%s376 + $0x8] sm:$0xff]
        %v379 = vld [vmem:[%s376 + $0x10] sm:$0xff]
        %v380 = vld [vmem:[%s376 + $0x18] sm:$0xff]
        %v381 = vld [vmem:[%s1] sm:$0xff]
        %v382 = vld [vmem:[%s2] sm:$0xff]
        %384 = vset.pattern.permute.xlu0 0
        %385 = vperm.xlu0 %384, %v382
        %v386 = vpop.permute.xlu0 %385
        %vm388 = vcmask 261120
        %v390 = vsel %vm388, %v381, 0
        %392 = vmatprep.subr.mxu0 0.0
        %393 = vmatpush1.msra.mxu0 %v377
        %394 = vmatprep.subr.mxu0 0.0
        %395 = vmatpush1.msra.mxu0 %v378
        %396 = vmatprep.subr.mxu0 0.0
        %397 = vmatpush1.msra.mxu0 %v379
        %398 = vmatprep.subr.mxu0 0.0
        %399 = vmatpush1.msra.mxu0 %v380
        %400 = vmatprep.subr.mxu0 0.0
        %401 = vmatpush1.msra.mxu0 0.0
        %402 = vmatprep.subr.mxu0 0.0
        %403 = vmatpush1.msra.mxu0 0.0
        %404 = vmatprep.subr.mxu0 0.0
        %405 = vmatpush1.msra.mxu0 0.0
        %406 = vmatprep.subr.mxu0 0.0
        %407 = vmatpush1.msra.mxu0 0.0
        %408 = vmatprep.subr.mxu0 0.0
        %409 = vmatpush1.msra.mxu0 0.0
        %410 = vmatprep.subr.mxu0 0.0
        %411 = vmatpush1.msra.mxu0 0.0
        %412 = vmatprep.subr.mxu0 0.0
        %413 = vmatpush1.msra.mxu0 0.0
        %414 = vmatprep.subr.mxu0 0.0
        %415 = vmatpush1.msra.mxu0 0.0
        %416 = vmatprep.subr.mxu0 0.0
        %417 = vmatpush1.msra.mxu0 0.0
        %418 = vmatprep.subr.mxu0 0.0
        %419 = vmatpush1.msra.mxu0 0.0
        %420 = vmatprep.subr.mxu0 0.0
        %421 = vmatpush1.msra.mxu0 0.0
        %422 = vmatprep.subr.mxu0 0.0
        %423 = vmatpush1.msra.mxu0 0.0
        %424 = vmatprep.subr.mxu0 0.0
        %425 = vmatpush1.msra.mxu0 0.0
        %426 = vmatprep.subr.mxu0 0.0
        %427 = vmatpush1.msra.mxu0 0.0
        %428 = vmatprep.subr.mxu0 0.0
        %429 = vmatpush1.msra.mxu0 0.0
        %430 = vmatprep.subr.mxu0 0.0
        %431 = vmatpush1.msra.mxu0 0.0
        %432 = vmatprep.subr.mxu0 0.0
        %433 = vmatpush1.msra.mxu0 0.0
        %434 = vmatprep.subr.mxu0 0.0
        %435 = vmatpush1.msra.mxu0 0.0
        %436 = vmatprep.subr.mxu0 0.0
        %437 = vmatpush1.msra.mxu0 0.0
        %438 = vmatprep.subr.mxu0 0.0
        %439 = vmatpush1.msra.mxu0 0.0
        %440 = vmatprep.subr.mxu0 0.0
        %441 = vmatpush1.msra.mxu0 0.0
        %442 = vmatprep.subr.mxu0 0.0
        %443 = vmatpush1.msra.mxu0 0.0
        %444 = vmatprep.subr.mxu0 0.0
        %445 = vmatpush1.msra.mxu0 0.0
        %446 = vmatprep.subr.mxu0 0.0
        %447 = vmatpush1.msra.mxu0 0.0
        %448 = vmatprep.subr.mxu0 0.0
        %449 = vmatpush1.msra.mxu0 0.0
        %450 = vmatprep.subr.mxu0 0.0
        %451 = vmatpush1.msra.mxu0 0.0
        %452 = vmatprep.subr.mxu0 0.0
        %453 = vmatpush1.msra.mxu0 0.0
        %454 = vmatprep.subr.mxu0 0.0
        %455 = vmatpush1.msra.mxu0 0.0
        %456 = vmatprep.mubr.f32.mxu0 0.0
        %457 = vmatmul.mubr.f32.gmra.mrb[0].mxu0 %v390
        %v458 = vpop.f32.mrb[0].mxu0
        %v459 = vadd.f32 %v386, %v458
        %v460 = vpop.f32.mrb[0].mxu0
        %461 = vdwg.mxu0
        %462 = vst [vmem:[%s368] sm:$0xff] %v459
        %v463 = vld [vmem:[%s3] sm:$0xff]
        %v464 = vld [vmem:[%s3 + $0x8] sm:$0xff]
        %v465 = vld [vmem:[%s3 + $0x10] sm:$0xff]
        %v466 = vld [vmem:[%s3 + $0x18] sm:$0xff]
        %v467 = vld [vmem:[%s3 + $0x20] sm:$0xff]
        %v468 = vld [vmem:[%s3 + $0x28] sm:$0xff]
        %v469 = vld [vmem:[%s3 + $0x30] sm:$0xff]
        %v470 = vld [vmem:[%s3 + $0x38] sm:$0xff]
        %v471 = vld [vmem:[%s3 + $0x40] sm:$0xff]
        %v472 = vld [vmem:[%s3 + $0x48] sm:$0xff]
        %v473 = vld [vmem:[%s3 + $0x50] sm:$0xff]
        %v474 = vld [vmem:[%s3 + $0x58] sm:$0xff]
        %v475 = vld [vmem:[%s3 + $0x60] sm:$0xff]
        %v476 = vld [vmem:[%s3 + $0x68] sm:$0xff]
        %v477 = vld [vmem:[%s3 + $0x70] sm:$0xff]
        %v478 = vld [vmem:[%s3 + $0x78] sm:$0xff]
        %v479 = vld [vmem:[%s3 + $0x80] sm:$0xff]
        %v480 = vld [vmem:[%s3 + $0x88] sm:$0xff]
        %v481 = vld [vmem:[%s3 + $0x90] sm:$0xff]
        %v482 = vld [vmem:[%s3 + $0x98] sm:$0xff]
        %v483 = vld [vmem:[%s3 + $0xa0] sm:$0xff]
        %v484 = vld [vmem:[%s3 + $0xa8] sm:$0xff]
        %v485 = vld [vmem:[%s3 + $0xb0] sm:$0xff]
        %v486 = vld [vmem:[%s3 + $0xb8] sm:$0xff]
        %v487 = vld [vmem:[%s3 + $0xc0] sm:$0xff]
        %v488 = vld [vmem:[%s3 + $0xc8] sm:$0xff]
        %v489 = vld [vmem:[%s3 + $0xd0] sm:$0xff]
        %v490 = vld [vmem:[%s3 + $0xd8] sm:$0xff]
        %v491 = vld [vmem:[%s3 + $0xe0] sm:$0xff]
        %v492 = vld [vmem:[%s3 + $0xe8] sm:$0xff]
        %v493 = vld [vmem:[%s3 + $0xf0] sm:$0xff]
        %v494 = vld [vmem:[%s3 + $0xf8] sm:$0xff]
        %vm495 = vcmask 64512
        %v497 = vsel %vm495, %v463, 0
        %v500 = vsel %vm495, %v464, 0
        %v503 = vsel %vm495, %v465, 0
        %v506 = vsel %vm495, %v466, 0
        %v509 = vsel %vm495, %v467, 0
        %v512 = vsel %vm495, %v468, 0
        %v515 = vsel %vm495, %v469, 0
        %v518 = vsel %vm495, %v470, 0
        %v521 = vsel %vm495, %v471, 0
        %v524 = vsel %vm495, %v472, 0
        %v527 = vsel %vm495, %v473, 0
        %v530 = vsel %vm495, %v474, 0
        %v533 = vsel %vm495, %v475, 0
        %v536 = vsel %vm495, %v476, 0
        %v539 = vsel %vm495, %v477, 0
        %v542 = vsel %vm495, %v478, 0
        %v545 = vsel %vm495, %v479, 0
        %v548 = vsel %vm495, %v480, 0
        %v551 = vsel %vm495, %v481, 0
        %v554 = vsel %vm495, %v482, 0
        %v557 = vsel %vm495, %v483, 0
        %v560 = vsel %vm495, %v484, 0
        %v563 = vsel %vm495, %v485, 0
        %v566 = vsel %vm495, %v486, 0
        %v569 = vsel %vm495, %v487, 0
        %v572 = vsel %vm495, %v488, 0
        %v575 = vsel %vm495, %v489, 0
        %v578 = vsel %vm495, %v490, 0
        %v581 = vsel %vm495, %v491, 0
        %v584 = vsel %vm495, %v492, 0
        %v587 = vsel %vm495, %v493, 0
        %v590 = vsel %vm495, %v494, 0
        %592 = vmatprep.subr.mxu0 0.0
        %593 = vmatpush1.msra.mxu0 %v459
        %594 = vmatprep.subr.mxu0 0.0
        %595 = vmatpush1.msra.mxu0 0.0
        %596 = vmatprep.subr.mxu0 0.0
        %597 = vmatpush1.msra.mxu0 0.0
        %598 = vmatprep.subr.mxu0 0.0
        %599 = vmatpush1.msra.mxu0 0.0
        %600 = vmatprep.subr.mxu0 0.0
        %601 = vmatpush1.msra.mxu0 0.0
        %602 = vmatprep.subr.mxu0 0.0
        %603 = vmatpush1.msra.mxu0 0.0
        %604 = vmatprep.subr.mxu0 0.0
        %605 = vmatpush1.msra.mxu0 0.0
        %606 = vmatprep.subr.mxu0 0.0
        %607 = vmatpush1.msra.mxu0 0.0
        %608 = vmatprep.subr.mxu0 0.0
        %609 = vmatpush1.msra.mxu0 0.0
        %610 = vmatprep.subr.mxu0 0.0
        %611 = vmatpush1.msra.mxu0 0.0
        %612 = vmatprep.subr.mxu0 0.0
        %613 = vmatpush1.msra.mxu0 0.0
        %614 = vmatprep.subr.mxu0 0.0
        %615 = vmatpush1.msra.mxu0 0.0
        %616 = vmatprep.subr.mxu0 0.0
        %617 = vmatpush1.msra.mxu0 0.0
        %618 = vmatprep.subr.mxu0 0.0
        %619 = vmatpush1.msra.mxu0 0.0
        %620 = vmatprep.subr.mxu0 0.0
        %621 = vmatpush1.msra.mxu0 0.0
        %622 = vmatprep.subr.mxu0 0.0
        %623 = vmatpush1.msra.mxu0 0.0
        %624 = vmatprep.subr.mxu0 0.0
        %625 = vmatpush1.msra.mxu0 0.0
        %626 = vmatprep.subr.mxu0 0.0
        %627 = vmatpush1.msra.mxu0 0.0
        %628 = vmatprep.subr.mxu0 0.0
        %629 = vmatpush1.msra.mxu0 0.0
        %630 = vmatprep.subr.mxu0 0.0
        %631 = vmatpush1.msra.mxu0 0.0
        %632 = vmatprep.subr.mxu0 0.0
        %633 = vmatpush1.msra.mxu0 0.0
        %634 = vmatprep.subr.mxu0 0.0
        %635 = vmatpush1.msra.mxu0 0.0
        %636 = vmatprep.subr.mxu0 0.0
        %637 = vmatpush1.msra.mxu0 0.0
        %638 = vmatprep.subr.mxu0 0.0
        %639 = vmatpush1.msra.mxu0 0.0
        %640 = vmatprep.subr.mxu0 0.0
        %641 = vmatpush1.msra.mxu0 0.0
        %642 = vmatprep.subr.mxu0 0.0
        %643 = vmatpush1.msra.mxu0 0.0
        %644 = vmatprep.subr.mxu0 0.0
        %645 = vmatpush1.msra.mxu0 0.0
        %646 = vmatprep.subr.mxu0 0.0
        %647 = vmatpush1.msra.mxu0 0.0
        %648 = vmatprep.subr.mxu0 0.0
        %649 = vmatpush1.msra.mxu0 0.0
        %650 = vmatprep.subr.mxu0 0.0
        %651 = vmatpush1.msra.mxu0 0.0
        %652 = vmatprep.subr.mxu0 0.0
        %653 = vmatpush1.msra.mxu0 0.0
        %654 = vmatprep.subr.mxu0 0.0
        %655 = vmatpush1.msra.mxu0 0.0
        %656 = vmatprep.mubr.f32.mxu0 0.0
        %657 = vmatmul.mubr.f32.gmra.mrb[0].mxu0 %v497
        %v658 = vpop.f32.mrb[0].mxu0
        %v659 = vadd.f32 0.0, %v658
        %v660 = vpop.f32.mrb[0].mxu0
        %661 = vmatprep.mubr.f32.mxu0 0.0
        %662 = vmatmul.mubr.f32.gmra.mrb[0].mxu0 %v500
        %v663 = vpop.f32.mrb[0].mxu0
        %v664 = vadd.f32 0.0, %v663
        %v665 = vpop.f32.mrb[0].mxu0
        %666 = vmatprep.mubr.f32.mxu0 0.0
        %667 = vmatmul.mubr.f32.gmra.mrb[0].mxu0 %v503
        %v668 = vpop.f32.mrb[0].mxu0
        %v669 = vadd.f32 0.0, %v668
        %v670 = vpop.f32.mrb[0].mxu0
        %671 = vmatprep.mubr.f32.mxu0 0.0
        %672 = vmatmul.mubr.f32.gmra.mrb[0].mxu0 %v506
        %v673 = vpop.f32.mrb[0].mxu0
        %v674 = vadd.f32 0.0, %v673
        %v675 = vpop.f32.mrb[0].mxu0
        %676 = vmatprep.mubr.f32.mxu0 0.0
        %677 = vmatmul.mubr.f32.gmra.mrb[0].mxu0 %v509
        %v678 = vpop.f32.mrb[0].mxu0
        %v679 = vadd.f32 0.0, %v678
        %v680 = vpop.f32.mrb[0].mxu0
        %681 = vmatprep.mubr.f32.mxu0 0.0
        %682 = vmatmul.mubr.f32.gmra.mrb[0].mxu0 %v512
        %v683 = vpop.f32.mrb[0].mxu0
        %v684 = vadd.f32 0.0, %v683
        %v685 = vpop.f32.mrb[0].mxu0
        %686 = vmatprep.mubr.f32.mxu0 0.0
        %687 = vmatmul.mubr.f32.gmra.mrb[0].mxu0 %v515
        %v688 = vpop.f32.mrb[0].mxu0
        %v689 = vadd.f32 0.0, %v688
        %v690 = vpop.f32.mrb[0].mxu0
        %691 = vmatprep.mubr.f32.mxu0 0.0
        %692 = vmatmul.mubr.f32.gmra.mrb[0].mxu0 %v518
        %v693 = vpop.f32.mrb[0].mxu0
        %v694 = vadd.f32 0.0, %v693
        %v695 = vpop.f32.mrb[0].mxu0
        %696 = vmatprep.mubr.f32.mxu0 0.0
        %697 = vmatmul.mubr.f32.gmra.mrb[0].mxu0 %v521
        %v698 = vpop.f32.mrb[0].mxu0
        %v699 = vadd.f32 0.0, %v698
        %v700 = vpop.f32.mrb[0].mxu0
        %701 = vmatprep.mubr.f32.mxu0 0.0
        %702 = vmatmul.mubr.f32.gmra.mrb[0].mxu0 %v524
        %v703 = vpop.f32.mrb[0].mxu0
        %v704 = vadd.f32 0.0, %v703
        %v705 = vpop.f32.mrb[0].mxu0
        %706 = vmatprep.mubr.f32.mxu0 0.0
        %707 = vmatmul.mubr.f32.gmra.mrb[0].mxu0 %v527
        %v708 = vpop.f32.mrb[0].mxu0
        %v709 = vadd.f32 0.0, %v708
        %v710 = vpop.f32.mrb[0].mxu0
        %711 = vmatprep.mubr.f32.mxu0 0.0
        %712 = vmatmul.mubr.f32.gmra.mrb[0].mxu0 %v530
        %v713 = vpop.f32.mrb[0].mxu0
        %v714 = vadd.f32 0.0, %v713
        %v715 = vpop.f32.mrb[0].mxu0
        %716 = vmatprep.mubr.f32.mxu0 0.0
        %717 = vmatmul.mubr.f32.gmra.mrb[0].mxu0 %v533
        %v718 = vpop.f32.mrb[0].mxu0
        %v719 = vadd.f32 0.0, %v718
        %v720 = vpop.f32.mrb[0].mxu0
        %721 = vmatprep.mubr.f32.mxu0 0.0
        %722 = vmatmul.mubr.f32.gmra.mrb[0].mxu0 %v536
        %v723 = vpop.f32.mrb[0].mxu0
        %v724 = vadd.f32 0.0, %v723
        %v725 = vpop.f32.mrb[0].mxu0
        %726 = vmatprep.mubr.f32.mxu0 0.0
        %727 = vmatmul.mubr.f32.gmra.mrb[0].mxu0 %v539
        %v728 = vpop.f32.mrb[0].mxu0
        %v729 = vadd.f32 0.0, %v728
        %v730 = vpop.f32.mrb[0].mxu0
        %731 = vmatprep.mubr.f32.mxu0 0.0
        %732 = vmatmul.mubr.f32.gmra.mrb[0].mxu0 %v542
        %v733 = vpop.f32.mrb[0].mxu0
        %v734 = vadd.f32 0.0, %v733
        %v735 = vpop.f32.mrb[0].mxu0
        %736 = vmatprep.mubr.f32.mxu0 0.0
        %737 = vmatmul.mubr.f32.gmra.mrb[0].mxu0 %v545
        %v738 = vpop.f32.mrb[0].mxu0
        %v739 = vadd.f32 0.0, %v738
        %v740 = vpop.f32.mrb[0].mxu0
        %741 = vmatprep.mubr.f32.mxu0 0.0
        %742 = vmatmul.mubr.f32.gmra.mrb[0].mxu0 %v548
        %v743 = vpop.f32.mrb[0].mxu0
        %v744 = vadd.f32 0.0, %v743
        %v745 = vpop.f32.mrb[0].mxu0
        %746 = vmatprep.mubr.f32.mxu0 0.0
        %747 = vmatmul.mubr.f32.gmra.mrb[0].mxu0 %v551
        %v748 = vpop.f32.mrb[0].mxu0
        %v749 = vadd.f32 0.0, %v748
        %v750 = vpop.f32.mrb[0].mxu0
        %751 = vmatprep.mubr.f32.mxu0 0.0
        %752 = vmatmul.mubr.f32.gmra.mrb[0].mxu0 %v554
        %v753 = vpop.f32.mrb[0].mxu0
        %v754 = vadd.f32 0.0, %v753
        %v755 = vpop.f32.mrb[0].mxu0
        %756 = vmatprep.mubr.f32.mxu0 0.0
        %757 = vmatmul.mubr.f32.gmra.mrb[0].mxu0 %v557
        %v758 = vpop.f32.mrb[0].mxu0
        %v759 = vadd.f32 0.0, %v758
        %v760 = vpop.f32.mrb[0].mxu0
        %761 = vmatprep.mubr.f32.mxu0 0.0
        %762 = vmatmul.mubr.f32.gmra.mrb[0].mxu0 %v560
        %v763 = vpop.f32.mrb[0].mxu0
        %v764 = vadd.f32 0.0, %v763
        %v765 = vpop.f32.mrb[0].mxu0
        %766 = vmatprep.mubr.f32.mxu0 0.0
        %767 = vmatmul.mubr.f32.gmra.mrb[0].mxu0 %v563
        %v768 = vpop.f32.mrb[0].mxu0
        %v769 = vadd.f32 0.0, %v768
        %v770 = vpop.f32.mrb[0].mxu0
        %771 = vmatprep.mubr.f32.mxu0 0.0
        %772 = vmatmul.mubr.f32.gmra.mrb[0].mxu0 %v566
        %v773 = vpop.f32.mrb[0].mxu0
        %v774 = vadd.f32 0.0, %v773
        %v775 = vpop.f32.mrb[0].mxu0
        %776 = vmatprep.mubr.f32.mxu0 0.0
        %777 = vmatmul.mubr.f32.gmra.mrb[0].mxu0 %v569
        %v778 = vpop.f32.mrb[0].mxu0
        %v779 = vadd.f32 0.0, %v778
        %v780 = vpop.f32.mrb[0].mxu0
        %781 = vmatprep.mubr.f32.mxu0 0.0
        %782 = vmatmul.mubr.f32.gmra.mrb[0].mxu0 %v572
        %v783 = vpop.f32.mrb[0].mxu0
        %v784 = vadd.f32 0.0, %v783
        %v785 = vpop.f32.mrb[0].mxu0
        %786 = vmatprep.mubr.f32.mxu0 0.0
        %787 = vmatmul.mubr.f32.gmra.mrb[0].mxu0 %v575
        %v788 = vpop.f32.mrb[0].mxu0
        %v789 = vadd.f32 0.0, %v788
        %v790 = vpop.f32.mrb[0].mxu0
        %791 = vmatprep.mubr.f32.mxu0 0.0
        %792 = vmatmul.mubr.f32.gmra.mrb[0].mxu0 %v578
        %v793 = vpop.f32.mrb[0].mxu0
        %v794 = vadd.f32 0.0, %v793
        %v795 = vpop.f32.mrb[0].mxu0
        %796 = vmatprep.mubr.f32.mxu0 0.0
        %797 = vmatmul.mubr.f32.gmra.mrb[0].mxu0 %v581
        %v798 = vpop.f32.mrb[0].mxu0
        %v799 = vadd.f32 0.0, %v798
        %v800 = vpop.f32.mrb[0].mxu0
        %801 = vmatprep.mubr.f32.mxu0 0.0
        %802 = vmatmul.mubr.f32.gmra.mrb[0].mxu0 %v584
        %v803 = vpop.f32.mrb[0].mxu0
        %v804 = vadd.f32 0.0, %v803
        %v805 = vpop.f32.mrb[0].mxu0
        %806 = vmatprep.mubr.f32.mxu0 0.0
        %807 = vmatmul.mubr.f32.gmra.mrb[0].mxu0 %v587
        %v808 = vpop.f32.mrb[0].mxu0
        %v809 = vadd.f32 0.0, %v808
        %v810 = vpop.f32.mrb[0].mxu0
        %811 = vmatprep.mubr.f32.mxu0 0.0
        %812 = vmatmul.mubr.f32.gmra.mrb[0].mxu0 %v590
        %v813 = vpop.f32.mrb[0].mxu0
        %v814 = vadd.f32 0.0, %v813
        %v815 = vpop.f32.mrb[0].mxu0
        %816 = vdwg.mxu0
        %v817 = vmul.f32 %v659, 2.0
        %v818 = vmul.f32 %v664, 2.0
        %v819 = vmul.f32 %v669, 2.0
        %v820 = vmul.f32 %v674, 2.0
        %v821 = vmul.f32 %v679, 2.0
        %v822 = vmul.f32 %v684, 2.0
        %v823 = vmul.f32 %v689, 2.0
        %v824 = vmul.f32 %v694, 2.0
        %v825 = vmul.f32 %v699, 2.0
        %v826 = vmul.f32 %v704, 2.0
        %v827 = vmul.f32 %v709, 2.0
        %v828 = vmul.f32 %v714, 2.0
        %v829 = vmul.f32 %v719, 2.0
        %v830 = vmul.f32 %v724, 2.0
        %v831 = vmul.f32 %v729, 2.0
        %v832 = vmul.f32 %v734, 2.0
        %v833 = vmul.f32 %v739, 2.0
        %v834 = vmul.f32 %v744, 2.0
        %v835 = vmul.f32 %v749, 2.0
        %v836 = vmul.f32 %v754, 2.0
        %v837 = vmul.f32 %v759, 2.0
        %v838 = vmul.f32 %v764, 2.0
        %v839 = vmul.f32 %v769, 2.0
        %v840 = vmul.f32 %v774, 2.0
        %v841 = vmul.f32 %v779, 2.0
        %v842 = vmul.f32 %v784, 2.0
        %v843 = vmul.f32 %v789, 2.0
        %v844 = vmul.f32 %v794, 2.0
        %v845 = vmul.f32 %v799, 2.0
        %v846 = vmul.f32 %v804, 2.0
        %v847 = vmul.f32 %v809, 2.0
        %v848 = vmul.f32 %v814, 2.0
        %v849 = vld [vmem:[%s4] sm:$0xff]
        %v850 = vld [vmem:[%s4 + $0x8] sm:$0xff]
        %v851 = vld [vmem:[%s4 + $0x10] sm:$0xff]
        %v852 = vld [vmem:[%s4 + $0x18] sm:$0xff]
        %v853 = vld [vmem:[%s4 + $0x20] sm:$0xff]
        %v854 = vld [vmem:[%s4 + $0x28] sm:$0xff]
        %v855 = vld [vmem:[%s4 + $0x30] sm:$0xff]
        %v856 = vld [vmem:[%s4 + $0x38] sm:$0xff]
        %v857 = vld [vmem:[%s4 + $0x40] sm:$0xff]
        %v858 = vld [vmem:[%s4 + $0x48] sm:$0xff]
        %v859 = vld [vmem:[%s4 + $0x50] sm:$0xff]
        %v860 = vld [vmem:[%s4 + $0x58] sm:$0xff]
        %v861 = vld [vmem:[%s4 + $0x60] sm:$0xff]
        %v862 = vld [vmem:[%s4 + $0x68] sm:$0xff]
        %v863 = vld [vmem:[%s4 + $0x70] sm:$0xff]
        %v864 = vld [vmem:[%s4 + $0x78] sm:$0xff]
        %v865 = vld [vmem:[%s4 + $0x80] sm:$0xff]
        %v866 = vld [vmem:[%s4 + $0x88] sm:$0xff]
        %v867 = vld [vmem:[%s4 + $0x90] sm:$0xff]
        %v868 = vld [vmem:[%s4 + $0x98] sm:$0xff]
        %v869 = vld [vmem:[%s4 + $0xa0] sm:$0xff]
        %v870 = vld [vmem:[%s4 + $0xa8] sm:$0xff]
        %v871 = vld [vmem:[%s4 + $0xb0] sm:$0xff]
        %v872 = vld [vmem:[%s4 + $0xb8] sm:$0xff]
        %v873 = vld [vmem:[%s4 + $0xc0] sm:$0xff]
        %v874 = vld [vmem:[%s4 + $0xc8] sm:$0xff]
        %v875 = vld [vmem:[%s4 + $0xd0] sm:$0xff]
        %v876 = vld [vmem:[%s4 + $0xd8] sm:$0xff]
        %v877 = vld [vmem:[%s4 + $0xe0] sm:$0xff]
        %v878 = vld [vmem:[%s4 + $0xe8] sm:$0xff]
        %v879 = vld [vmem:[%s4 + $0xf0] sm:$0xff]
        %v880 = vld [vmem:[%s4 + $0xf8] sm:$0xff]
        %882 = vset.pattern.permute.xlu0 0
        %883 = vperm.xlu0 %882, %v849
        %v884 = vpop.permute.xlu0 %883
        %887 = vset.pattern.permute.xlu0 0
        %888 = vperm.xlu0 %887, %v850
        %v889 = vpop.permute.xlu0 %888
        %892 = vset.pattern.permute.xlu0 0
        %893 = vperm.xlu0 %892, %v851
        %v894 = vpop.permute.xlu0 %893
        %897 = vset.pattern.permute.xlu0 0
        %898 = vperm.xlu0 %897, %v852
        %v899 = vpop.permute.xlu0 %898
        %902 = vset.pattern.permute.xlu0 0
        %903 = vperm.xlu0 %902, %v853
        %v904 = vpop.permute.xlu0 %903
        %907 = vset.pattern.permute.xlu0 0
        %908 = vperm.xlu0 %907, %v854
        %v909 = vpop.permute.xlu0 %908
        %912 = vset.pattern.permute.xlu0 0
        %913 = vperm.xlu0 %912, %v855
        %v914 = vpop.permute.xlu0 %913
        %917 = vset.pattern.permute.xlu0 0
        %918 = vperm.xlu0 %917, %v856
        %v919 = vpop.permute.xlu0 %918
        %922 = vset.pattern.permute.xlu0 0
        %923 = vperm.xlu0 %922, %v857
        %v924 = vpop.permute.xlu0 %923
        %927 = vset.pattern.permute.xlu0 0
        %928 = vperm.xlu0 %927, %v858
        %v929 = vpop.permute.xlu0 %928
        %932 = vset.pattern.permute.xlu0 0
        %933 = vperm.xlu0 %932, %v859
        %v934 = vpop.permute.xlu0 %933
        %937 = vset.pattern.permute.xlu0 0
        %938 = vperm.xlu0 %937, %v860
        %v939 = vpop.permute.xlu0 %938
        %942 = vset.pattern.permute.xlu0 0
        %943 = vperm.xlu0 %942, %v861
        %v944 = vpop.permute.xlu0 %943
        %947 = vset.pattern.permute.xlu0 0
        %948 = vperm.xlu0 %947, %v862
        %v949 = vpop.permute.xlu0 %948
        %952 = vset.pattern.permute.xlu0 0
        %953 = vperm.xlu0 %952, %v863
        %v954 = vpop.permute.xlu0 %953
        %957 = vset.pattern.permute.xlu0 0
        %958 = vperm.xlu0 %957, %v864
        %v959 = vpop.permute.xlu0 %958
        %962 = vset.pattern.permute.xlu0 0
        %963 = vperm.xlu0 %962, %v865
        %v964 = vpop.permute.xlu0 %963
        %967 = vset.pattern.permute.xlu0 0
        %968 = vperm.xlu0 %967, %v866
        %v969 = vpop.permute.xlu0 %968
        %972 = vset.pattern.permute.xlu0 0
        %973 = vperm.xlu0 %972, %v867
        %v974 = vpop.permute.xlu0 %973
        %977 = vset.pattern.permute.xlu0 0
        %978 = vperm.xlu0 %977, %v868
        %v979 = vpop.permute.xlu0 %978
        %982 = vset.pattern.permute.xlu0 0
        %983 = vperm.xlu0 %982, %v869
        %v984 = vpop.permute.xlu0 %983
        %987 = vset.pattern.permute.xlu0 0
        %988 = vperm.xlu0 %987, %v870
        %v989 = vpop.permute.xlu0 %988
        %992 = vset.pattern.permute.xlu0 0
        %993 = vperm.xlu0 %992, %v871
        %v994 = vpop.permute.xlu0 %993
        %997 = vset.pattern.permute.xlu0 0
        %998 = vperm.xlu0 %997, %v872
        %v999 = vpop.permute.xlu0 %998
        %1002 = vset.pattern.permute.xlu0 0
        %1003 = vperm.xlu0 %1002, %v873
        %v1004 = vpop.permute.xlu0 %1003
        %1007 = vset.pattern.permute.xlu0 0
        %1008 = vperm.xlu0 %1007, %v874
        %v1009 = vpop.permute.xlu0 %1008
        %1012 = vset.pattern.permute.xlu0 0
        %1013 = vperm.xlu0 %1012, %v875
        %v1014 = vpop.permute.xlu0 %1013
        %1017 = vset.pattern.permute.xlu0 0
        %1018 = vperm.xlu0 %1017, %v876
        %v1019 = vpop.permute.xlu0 %1018
        %1022 = vset.pattern.permute.xlu0 0
        %1023 = vperm.xlu0 %1022, %v877
        %v1024 = vpop.permute.xlu0 %1023
        %1027 = vset.pattern.permute.xlu0 0
        %1028 = vperm.xlu0 %1027, %v878
        %v1029 = vpop.permute.xlu0 %1028
        %1032 = vset.pattern.permute.xlu0 0
        %1033 = vperm.xlu0 %1032, %v879
        %v1034 = vpop.permute.xlu0 %1033
        %1037 = vset.pattern.permute.xlu0 0
        %1038 = vperm.xlu0 %1037, %v880
        %v1039 = vpop.permute.xlu0 %1038
        %v1041 = vsub.f32 %v817, %v884
        %v1042 = vsub.f32 %v818, %v889
        %v1043 = vsub.f32 %v819, %v894
        %v1044 = vsub.f32 %v820, %v899
        %v1045 = vsub.f32 %v821, %v904
        %v1046 = vsub.f32 %v822, %v909
        %v1047 = vsub.f32 %v823, %v914
        %v1048 = vsub.f32 %v824, %v919
        %v1049 = vsub.f32 %v825, %v924
        %v1050 = vsub.f32 %v826, %v929
        %v1051 = vsub.f32 %v827, %v934
        %v1052 = vsub.f32 %v828, %v939
        %v1053 = vsub.f32 %v829, %v944
        %v1054 = vsub.f32 %v830, %v949
        %v1055 = vsub.f32 %v831, %v954
        %v1056 = vsub.f32 %v832, %v959
        %v1057 = vsub.f32 %v833, %v964
        %v1058 = vsub.f32 %v834, %v969
        %v1059 = vsub.f32 %v835, %v974
        %v1060 = vsub.f32 %v836, %v979
        %v1061 = vsub.f32 %v837, %v984
        %v1062 = vsub.f32 %v838, %v989
        %v1063 = vsub.f32 %v839, %v994
        %v1064 = vsub.f32 %v840, %v999
        %v1065 = vsub.f32 %v841, %v1004
        %v1066 = vsub.f32 %v842, %v1009
        %v1067 = vsub.f32 %v843, %v1014
        %v1068 = vsub.f32 %v844, %v1019
        %v1069 = vsub.f32 %v845, %v1024
        %v1070 = vsub.f32 %v846, %v1029
        %v1071 = vsub.f32 %v847, %v1034
        %v1072 = vsub.f32 %v848, %v1039
        %v1073 = vlaneseq
        %v1074 = vshrl.u32 %v1073, 7
        %v1075 = vadd.s32 %v1074, 8
        %v1076 = vadd.s32 %v1074, 16
        %v1077 = vadd.s32 %v1074, 24
        %v1078 = vadd.s32 %v1074, 32
        %v1079 = vadd.s32 %v1074, 40
        %v1080 = vadd.s32 %v1074, 48
        %v1081 = vadd.s32 %v1074, 56
        %v1082 = vadd.s32 %v1074, 64
        %v1083 = vadd.s32 %v1074, 72
        %v1084 = vadd.s32 %v1074, 80
        %v1085 = vadd.s32 %v1074, 88
        %v1086 = vadd.s32 %v1074, 96
        %v1087 = vadd.s32 %v1074, 104
        %v1088 = vadd.s32 %v1074, 112
        %v1089 = vadd.s32 %v1074, 120
        %v1090 = vadd.s32 %v1074, 128
        %v1091 = vadd.s32 %v1074, 136
        %v1092 = vadd.s32 %v1074, 144
        %v1093 = vadd.s32 %v1074, 152
        %v1094 = vadd.s32 %v1074, 160
        %v1095 = vadd.s32 %v1074, 168
        %v1096 = vadd.s32 %v1074, 176
        %v1097 = vadd.s32 %v1074, 184
        %v1098 = vadd.s32 %v1074, 192
        %v1099 = vadd.s32 %v1074, 200
        %v1100 = vadd.s32 %v1074, 208
        %v1101 = vadd.s32 %v1074, 216
        %v1102 = vadd.s32 %v1074, 224
        %v1103 = vadd.s32 %v1074, 232
        %v1104 = vadd.s32 %v1074, 240
        %v1105 = vadd.s32 %v1074, 248
        %v1106 = vmax.f32 %v1041, %v1045
        %v1107 = vmax.f32 %v1042, %v1046
        %v1108 = vmax.f32 %v1043, %v1047
        %v1109 = vmax.f32 %v1044, %v1048
        %v1110 = vmax.f32 %v1106, %v1049
        %v1111 = vmax.f32 %v1107, %v1050
        %v1112 = vmax.f32 %v1108, %v1051
        %v1113 = vmax.f32 %v1109, %v1052
        %v1114 = vmax.f32 %v1110, %v1053
        %v1115 = vmax.f32 %v1111, %v1054
        %v1116 = vmax.f32 %v1112, %v1055
        %v1117 = vmax.f32 %v1113, %v1056
        %v1118 = vmax.f32 %v1114, %v1057
        %v1119 = vmax.f32 %v1115, %v1058
        %v1120 = vmax.f32 %v1116, %v1059
        %v1121 = vmax.f32 %v1117, %v1060
        %v1122 = vmax.f32 %v1118, %v1061
        %v1123 = vmax.f32 %v1119, %v1062
        %v1124 = vmax.f32 %v1120, %v1063
        %v1125 = vmax.f32 %v1121, %v1064
        %v1126 = vmax.f32 %v1122, %v1065
        %v1127 = vmax.f32 %v1123, %v1066
        %v1128 = vmax.f32 %v1124, %v1067
        %v1129 = vmax.f32 %v1125, %v1068
        %v1130 = vmax.f32 %v1126, %v1069
        %v1131 = vmax.f32 %v1127, %v1070
        %v1132 = vmax.f32 %v1128, %v1071
        %v1133 = vmax.f32 %v1129, %v1072
        %v1134 = vmax.f32 %v1130, %v1131
        %v1135 = vmax.f32 %v1132, %v1133
        %v1136 = vmax.f32 %v1134, %v1135
        %v1137 = vrot.slane %v1136, 4
        %v1138 = vmax.f32 %v1136, %v1137
        %v1139 = vrot.slane %v1138, 2
        %v1140 = vmax.f32 %v1138, %v1139
        %v1141 = vrot.slane %v1140, 1
        %v1142 = vmax.f32 %v1140, %v1141
        %vm1143 = vcmp.eq.f32.partialorder %v1041, %v1142
        %vm1144 = vcmp.eq.f32.partialorder %v1042, %v1142
        %vm1145 = vcmp.eq.f32.partialorder %v1043, %v1142
        %vm1146 = vcmp.eq.f32.partialorder %v1044, %v1142
        %vm1147 = vcmp.eq.f32.partialorder %v1045, %v1142
        %vm1148 = vcmp.eq.f32.partialorder %v1046, %v1142
        %vm1149 = vcmp.eq.f32.partialorder %v1047, %v1142
        %vm1150 = vcmp.eq.f32.partialorder %v1048, %v1142
        %vm1151 = vcmp.eq.f32.partialorder %v1049, %v1142
        %vm1152 = vcmp.eq.f32.partialorder %v1050, %v1142
        %vm1153 = vcmp.eq.f32.partialorder %v1051, %v1142
        %vm1154 = vcmp.eq.f32.partialorder %v1052, %v1142
        %vm1155 = vcmp.eq.f32.partialorder %v1053, %v1142
        %vm1156 = vcmp.eq.f32.partialorder %v1054, %v1142
        %vm1157 = vcmp.eq.f32.partialorder %v1055, %v1142
        %vm1158 = vcmp.eq.f32.partialorder %v1056, %v1142
        %vm1159 = vcmp.eq.f32.partialorder %v1057, %v1142
        %vm1160 = vcmp.eq.f32.partialorder %v1058, %v1142
        %vm1161 = vcmp.eq.f32.partialorder %v1059, %v1142
        %vm1162 = vcmp.eq.f32.partialorder %v1060, %v1142
        %vm1163 = vcmp.eq.f32.partialorder %v1061, %v1142
        %vm1164 = vcmp.eq.f32.partialorder %v1062, %v1142
        %vm1165 = vcmp.eq.f32.partialorder %v1063, %v1142
        %vm1166 = vcmp.eq.f32.partialorder %v1064, %v1142
        %vm1167 = vcmp.eq.f32.partialorder %v1065, %v1142
        %vm1168 = vcmp.eq.f32.partialorder %v1066, %v1142
        %vm1169 = vcmp.eq.f32.partialorder %v1067, %v1142
        %vm1170 = vcmp.eq.f32.partialorder %v1068, %v1142
        %vm1171 = vcmp.eq.f32.partialorder %v1069, %v1142
        %vm1172 = vcmp.eq.f32.partialorder %v1070, %v1142
        %vm1173 = vcmp.eq.f32.partialorder %v1071, %v1142
        %vm1174 = vcmp.eq.f32.partialorder %v1072, %v1142
        %v1175 = vsel %vm1143, %v1074, 256
        %v1176 = vsel %vm1144, %v1075, 256
        %v1177 = vsel %vm1145, %v1076, 256
        %v1178 = vsel %vm1146, %v1077, 256
        %v1179 = vsel %vm1147, %v1078, 256
        %v1180 = vsel %vm1148, %v1079, 256
        %v1181 = vsel %vm1149, %v1080, 256
        %v1182 = vsel %vm1150, %v1081, 256
        %v1183 = vsel %vm1151, %v1082, 256
        %v1184 = vsel %vm1152, %v1083, 256
        %v1185 = vsel %vm1153, %v1084, 256
        %v1186 = vsel %vm1154, %v1085, 256
        %v1187 = vsel %vm1155, %v1086, 256
        %v1188 = vsel %vm1156, %v1087, 256
        %v1189 = vsel %vm1157, %v1088, 256
        %v1190 = vsel %vm1158, %v1089, 256
        %v1191 = vsel %vm1159, %v1090, 256
        %v1192 = vsel %vm1160, %v1091, 256
        %v1193 = vsel %vm1161, %v1092, 256
        %v1194 = vsel %vm1162, %v1093, 256
        %v1195 = vsel %vm1163, %v1094, 256
        %v1196 = vsel %vm1164, %v1095, 256
        %v1197 = vsel %vm1165, %v1096, 256
        %v1198 = vsel %vm1166, %v1097, 256
        %v1199 = vsel %vm1167, %v1098, 256
        %v1200 = vsel %vm1168, %v1099, 256
        %v1201 = vsel %vm1169, %v1100, 256
        %v1202 = vsel %vm1170, %v1101, 256
        %v1203 = vsel %vm1171, %v1102, 256
        %v1204 = vsel %vm1172, %v1103, 256
        %v1205 = vsel %vm1173, %v1104, 256
        %v1206 = vsel %vm1174, %v1105, 256
        %vm1207 = vcmp.lt.s32.totalorder %v1175, %v1179
        %v1208 = vsel %vm1207, %v1175, %v1179
        %vm1209 = vcmp.lt.s32.totalorder %v1176, %v1180
        %v1210 = vsel %vm1209, %v1176, %v1180
        %vm1211 = vcmp.lt.s32.totalorder %v1177, %v1181
        %v1212 = vsel %vm1211, %v1177, %v1181
        %vm1213 = vcmp.lt.s32.totalorder %v1178, %v1182
        %v1214 = vsel %vm1213, %v1178, %v1182
        %vm1215 = vcmp.lt.s32.totalorder %v1208, %v1183
        %v1216 = vsel %vm1215, %v1208, %v1183
        %vm1217 = vcmp.lt.s32.totalorder %v1210, %v1184
        %v1218 = vsel %vm1217, %v1210, %v1184
        %vm1219 = vcmp.lt.s32.totalorder %v1212, %v1185
        %v1220 = vsel %vm1219, %v1212, %v1185
        %vm1221 = vcmp.lt.s32.totalorder %v1214, %v1186
        %v1222 = vsel %vm1221, %v1214, %v1186
        %vm1223 = vcmp.lt.s32.totalorder %v1216, %v1187
        %v1224 = vsel %vm1223, %v1216, %v1187
        %vm1225 = vcmp.lt.s32.totalorder %v1218, %v1188
        %v1226 = vsel %vm1225, %v1218, %v1188
        %vm1227 = vcmp.lt.s32.totalorder %v1220, %v1189
        %v1228 = vsel %vm1227, %v1220, %v1189
        %vm1229 = vcmp.lt.s32.totalorder %v1222, %v1190
        %v1230 = vsel %vm1229, %v1222, %v1190
        %vm1231 = vcmp.lt.s32.totalorder %v1224, %v1191
        %v1232 = vsel %vm1231, %v1224, %v1191
        %vm1233 = vcmp.lt.s32.totalorder %v1226, %v1192
        %v1234 = vsel %vm1233, %v1226, %v1192
        %vm1235 = vcmp.lt.s32.totalorder %v1228, %v1193
        %v1236 = vsel %vm1235, %v1228, %v1193
        %vm1237 = vcmp.lt.s32.totalorder %v1230, %v1194
        %v1238 = vsel %vm1237, %v1230, %v1194
        %vm1239 = vcmp.lt.s32.totalorder %v1232, %v1195
        %v1240 = vsel %vm1239, %v1232, %v1195
        %vm1241 = vcmp.lt.s32.totalorder %v1234, %v1196
        %v1242 = vsel %vm1241, %v1234, %v1196
        %vm1243 = vcmp.lt.s32.totalorder %v1236, %v1197
        %v1244 = vsel %vm1243, %v1236, %v1197
        %vm1245 = vcmp.lt.s32.totalorder %v1238, %v1198
        %v1246 = vsel %vm1245, %v1238, %v1198
        %vm1247 = vcmp.lt.s32.totalorder %v1240, %v1199
        %v1248 = vsel %vm1247, %v1240, %v1199
        %vm1249 = vcmp.lt.s32.totalorder %v1242, %v1200
        %v1250 = vsel %vm1249, %v1242, %v1200
        %vm1251 = vcmp.lt.s32.totalorder %v1244, %v1201
        %v1252 = vsel %vm1251, %v1244, %v1201
        %vm1253 = vcmp.lt.s32.totalorder %v1246, %v1202
        %v1254 = vsel %vm1253, %v1246, %v1202
        %vm1255 = vcmp.lt.s32.totalorder %v1248, %v1203
        %v1256 = vsel %vm1255, %v1248, %v1203
        %vm1257 = vcmp.lt.s32.totalorder %v1250, %v1204
        %v1258 = vsel %vm1257, %v1250, %v1204
        %vm1259 = vcmp.lt.s32.totalorder %v1252, %v1205
        %v1260 = vsel %vm1259, %v1252, %v1205
        %vm1261 = vcmp.lt.s32.totalorder %v1254, %v1206
        %v1262 = vsel %vm1261, %v1254, %v1206
        %vm1263 = vcmp.lt.s32.totalorder %v1256, %v1258
        %v1264 = vsel %vm1263, %v1256, %v1258
        %vm1265 = vcmp.lt.s32.totalorder %v1260, %v1262
        %v1266 = vsel %vm1265, %v1260, %v1262
        %vm1267 = vcmp.lt.s32.totalorder %v1264, %v1266
        %v1268 = vsel %vm1267, %v1264, %v1266
        %v1269 = vrot.slane %v1268, 4
        %vm1270 = vcmp.lt.s32.totalorder %v1268, %v1269
        %v1271 = vsel %vm1270, %v1268, %v1269
        %v1272 = vrot.slane %v1271, 2
        %vm1273 = vcmp.lt.s32.totalorder %v1271, %v1272
        %v1274 = vsel %vm1273, %v1271, %v1272
        %v1275 = vrot.slane %v1274, 1
        %vm1276 = vcmp.lt.s32.totalorder %v1274, %v1275
        %v1277 = vsel %vm1276, %v1274, %v1275
        %1278 = vst [vmem:[%s361] sm:$0x1] %v1277
        %vm1279 = vcmp.eq.s32.totalorder %v1074, %v1277
        %vm1280 = vcmp.eq.s32.totalorder %v1075, %v1277
        %vm1281 = vcmp.eq.s32.totalorder %v1076, %v1277
        %vm1282 = vcmp.eq.s32.totalorder %v1077, %v1277
        %vm1283 = vcmp.eq.s32.totalorder %v1078, %v1277
        %vm1284 = vcmp.eq.s32.totalorder %v1079, %v1277
        %vm1285 = vcmp.eq.s32.totalorder %v1080, %v1277
        %vm1286 = vcmp.eq.s32.totalorder %v1081, %v1277
        %vm1287 = vcmp.eq.s32.totalorder %v1082, %v1277
        %vm1288 = vcmp.eq.s32.totalorder %v1083, %v1277
        %vm1289 = vcmp.eq.s32.totalorder %v1084, %v1277
        %vm1290 = vcmp.eq.s32.totalorder %v1085, %v1277
        %vm1291 = vcmp.eq.s32.totalorder %v1086, %v1277
        %vm1292 = vcmp.eq.s32.totalorder %v1087, %v1277
        %vm1293 = vcmp.eq.s32.totalorder %v1088, %v1277
        %vm1294 = vcmp.eq.s32.totalorder %v1089, %v1277
        %vm1295 = vcmp.eq.s32.totalorder %v1090, %v1277
        %vm1296 = vcmp.eq.s32.totalorder %v1091, %v1277
        %vm1297 = vcmp.eq.s32.totalorder %v1092, %v1277
        %vm1298 = vcmp.eq.s32.totalorder %v1093, %v1277
        %vm1299 = vcmp.eq.s32.totalorder %v1094, %v1277
        %vm1300 = vcmp.eq.s32.totalorder %v1095, %v1277
        %vm1301 = vcmp.eq.s32.totalorder %v1096, %v1277
        %vm1302 = vcmp.eq.s32.totalorder %v1097, %v1277
        %vm1303 = vcmp.eq.s32.totalorder %v1098, %v1277
        %vm1304 = vcmp.eq.s32.totalorder %v1099, %v1277
        %vm1305 = vcmp.eq.s32.totalorder %v1100, %v1277
        %vm1306 = vcmp.eq.s32.totalorder %v1101, %v1277
        %vm1307 = vcmp.eq.s32.totalorder %v1102, %v1277
        %vm1308 = vcmp.eq.s32.totalorder %v1103, %v1277
        %vm1309 = vcmp.eq.s32.totalorder %v1104, %v1277
        %vm1310 = vcmp.eq.s32.totalorder %v1105, %v1277
        %v1311 = vsel %vm1279, 1, 0
        %v1312 = vsel %vm1280, 1, 0
        %v1313 = vsel %vm1281, 1, 0
        %v1314 = vsel %vm1282, 1, 0
        %v1315 = vsel %vm1283, 1, 0
        %v1316 = vsel %vm1284, 1, 0
        %v1317 = vsel %vm1285, 1, 0
        %v1318 = vsel %vm1286, 1, 0
        %v1319 = vsel %vm1287, 1, 0
        %v1320 = vsel %vm1288, 1, 0
        %v1321 = vsel %vm1289, 1, 0
        %v1322 = vsel %vm1290, 1, 0
        %v1323 = vsel %vm1291, 1, 0
        %v1324 = vsel %vm1292, 1, 0
        %v1325 = vsel %vm1293, 1, 0
        %v1326 = vsel %vm1294, 1, 0
        %v1327 = vsel %vm1295, 1, 0
        %v1328 = vsel %vm1296, 1, 0
        %v1329 = vsel %vm1297, 1, 0
        %v1330 = vsel %vm1298, 1, 0
        %v1331 = vsel %vm1299, 1, 0
        %v1332 = vsel %vm1300, 1, 0
        %v1333 = vsel %vm1301, 1, 0
        %v1334 = vsel %vm1302, 1, 0
        %v1335 = vsel %vm1303, 1, 0
        %v1336 = vsel %vm1304, 1, 0
        %v1337 = vsel %vm1305, 1, 0
        %v1338 = vsel %vm1306, 1, 0
        %v1339 = vsel %vm1307, 1, 0
        %v1340 = vsel %vm1308, 1, 0
        %v1341 = vsel %vm1309, 1, 0
        %v1342 = vsel %vm1310, 1, 0
        %v1343 = vcvt.s32.f32 %v1311
        %v1344 = vcvt.s32.f32 %v1312
        %v1345 = vcvt.s32.f32 %v1313
        %v1346 = vcvt.s32.f32 %v1314
        %v1347 = vcvt.s32.f32 %v1315
        %v1348 = vcvt.s32.f32 %v1316
        %v1349 = vcvt.s32.f32 %v1317
        %v1350 = vcvt.s32.f32 %v1318
        %v1351 = vcvt.s32.f32 %v1319
        %v1352 = vcvt.s32.f32 %v1320
        %v1353 = vcvt.s32.f32 %v1321
        %v1354 = vcvt.s32.f32 %v1322
        %v1355 = vcvt.s32.f32 %v1323
        %v1356 = vcvt.s32.f32 %v1324
        %v1357 = vcvt.s32.f32 %v1325
        %v1358 = vcvt.s32.f32 %v1326
        %v1359 = vcvt.s32.f32 %v1327
        %v1360 = vcvt.s32.f32 %v1328
        %v1361 = vcvt.s32.f32 %v1329
        %v1362 = vcvt.s32.f32 %v1330
        %v1363 = vcvt.s32.f32 %v1331
        %v1364 = vcvt.s32.f32 %v1332
        %v1365 = vcvt.s32.f32 %v1333
        %v1366 = vcvt.s32.f32 %v1334
        %v1367 = vcvt.s32.f32 %v1335
        %v1368 = vcvt.s32.f32 %v1336
        %v1369 = vcvt.s32.f32 %v1337
        %v1370 = vcvt.s32.f32 %v1338
        %v1371 = vcvt.s32.f32 %v1339
        %v1372 = vcvt.s32.f32 %v1340
        %v1373 = vcvt.s32.f32 %v1341
        %v1374 = vcvt.s32.f32 %v1342
        %v1375 = vld [vmem:[%s5] sm:$0xff]
        %v1376 = vld [vmem:[%s5 + $0x8] sm:$0xff]
        %v1377 = vld [vmem:[%s5 + $0x10] sm:$0xff]
        %v1378 = vld [vmem:[%s5 + $0x18] sm:$0xff]
        %v1379 = vld [vmem:[%s5 + $0x20] sm:$0xff]
        %v1380 = vld [vmem:[%s5 + $0x28] sm:$0xff]
        %v1381 = vld [vmem:[%s5 + $0x30] sm:$0xff]
        %v1382 = vld [vmem:[%s5 + $0x38] sm:$0xff]
        %v1383 = vld [vmem:[%s6] sm:$0xff]
        %v1384 = vld [vmem:[%s6 + $0x8] sm:$0xff]
        %v1385 = vld [vmem:[%s6 + $0x10] sm:$0xff]
        %v1386 = vld [vmem:[%s6 + $0x18] sm:$0xff]
        %1388 = vset.pattern.permute.xlu0 0
        %1389 = vperm.xlu0 %1388, %v1383
        %v1390 = vpop.permute.xlu0 %1389
        %1393 = vset.pattern.permute.xlu0 0
        %1394 = vperm.xlu0 %1393, %v1384
        %v1395 = vpop.permute.xlu0 %1394
        %1398 = vset.pattern.permute.xlu0 0
        %1399 = vperm.xlu0 %1398, %v1385
        %v1400 = vpop.permute.xlu0 %1399
        %1403 = vset.pattern.permute.xlu0 0
        %1404 = vperm.xlu0 %1403, %v1386
        %v1405 = vpop.permute.xlu0 %1404
        %1407 = vmatprep.subr.mxu0 0.0
        %1408 = vmatpush1.msra.mxu0 %v1343
        %1409 = vmatprep.subr.mxu0 0.0
        %1410 = vmatpush1.msra.mxu0 %v1344
        %1411 = vmatprep.subr.mxu0 0.0
        %1412 = vmatpush1.msra.mxu0 %v1345
        %1413 = vmatprep.subr.mxu0 0.0
        %1414 = vmatpush1.msra.mxu0 %v1346
        %1415 = vmatprep.subr.mxu0 0.0
        %1416 = vmatpush1.msra.mxu0 %v1347
        %1417 = vmatprep.subr.mxu0 0.0
        %1418 = vmatpush1.msra.mxu0 %v1348
        %1419 = vmatprep.subr.mxu0 0.0
        %1420 = vmatpush1.msra.mxu0 %v1349
        %1421 = vmatprep.subr.mxu0 0.0
        %1422 = vmatpush1.msra.mxu0 %v1350
        %1423 = vmatprep.subr.mxu0 0.0
        %1424 = vmatpush1.msra.mxu0 %v1351
        %1425 = vmatprep.subr.mxu0 0.0
        %1426 = vmatpush1.msra.mxu0 %v1352
        %1427 = vmatprep.subr.mxu0 0.0
        %1428 = vmatpush1.msra.mxu0 %v1353
        %1429 = vmatprep.subr.mxu0 0.0
        %1430 = vmatpush1.msra.mxu0 %v1354
        %1431 = vmatprep.subr.mxu0 0.0
        %1432 = vmatpush1.msra.mxu0 %v1355
        %1433 = vmatprep.subr.mxu0 0.0
        %1434 = vmatpush1.msra.mxu0 %v1356
        %1435 = vmatprep.subr.mxu0 0.0
        %1436 = vmatpush1.msra.mxu0 %v1357
        %1437 = vmatprep.subr.mxu0 0.0
        %1438 = vmatpush1.msra.mxu0 %v1358
        %1439 = vmatprep.subr.mxu0 0.0
        %1440 = vmatpush1.msra.mxu0 %v1359
        %1441 = vmatprep.subr.mxu0 0.0
        %1442 = vmatpush1.msra.mxu0 %v1360
        %1443 = vmatprep.subr.mxu0 0.0
        %1444 = vmatpush1.msra.mxu0 %v1361
        %1445 = vmatprep.subr.mxu0 0.0
        %1446 = vmatpush1.msra.mxu0 %v1362
        %1447 = vmatprep.subr.mxu0 0.0
        %1448 = vmatpush1.msra.mxu0 %v1363
        %1449 = vmatprep.subr.mxu0 0.0
        %1450 = vmatpush1.msra.mxu0 %v1364
        %1451 = vmatprep.subr.mxu0 0.0
        %1452 = vmatpush1.msra.mxu0 %v1365
        %1453 = vmatprep.subr.mxu0 0.0
        %1454 = vmatpush1.msra.mxu0 %v1366
        %1455 = vmatprep.subr.mxu0 0.0
        %1456 = vmatpush1.msra.mxu0 %v1367
        %1457 = vmatprep.subr.mxu0 0.0
        %1458 = vmatpush1.msra.mxu0 %v1368
        %1459 = vmatprep.subr.mxu0 0.0
        %1460 = vmatpush1.msra.mxu0 %v1369
        %1461 = vmatprep.subr.mxu0 0.0
        %1462 = vmatpush1.msra.mxu0 %v1370
        %1463 = vmatprep.subr.mxu0 0.0
        %1464 = vmatpush1.msra.mxu0 %v1371
        %1465 = vmatprep.subr.mxu0 0.0
        %1466 = vmatpush1.msra.mxu0 %v1372
        %1467 = vmatprep.subr.mxu0 0.0
        %1468 = vmatpush1.msra.mxu0 %v1373
        %1469 = vmatprep.subr.mxu0 0.0
        %1470 = vmatpush1.msra.mxu0 %v1374
        %1471 = vmatprep.mubr.f32.mxu0 %v1376
        %1472 = vmatmul.mubr.f32.gmra.mrb[0].mxu0 %v1375
        %v1473 = vpop.f32.mrb[0].mxu0
        %v1474 = vadd.f32 %v1390, %v1473
        %v1475 = vpop.f32.mrb[0].mxu0
        %1476 = vmatprep.mubr.f32.mxu0 %v1378
        %1477 = vmatmul.mubr.f32.gmra.mrb[0].mxu0 %v1377
        %v1478 = vpop.f32.mrb[0].mxu0
        %v1479 = vadd.f32 %v1395, %v1478
        %v1480 = vpop.f32.mrb[0].mxu0
        %1481 = vmatprep.mubr.f32.mxu0 %v1380
        %1482 = vmatmul.mubr.f32.gmra.mrb[0].mxu0 %v1379
        %v1483 = vpop.f32.mrb[0].mxu0
        %v1484 = vadd.f32 %v1400, %v1483
        %v1485 = vpop.f32.mrb[0].mxu0
        %1486 = vmatprep.mubr.f32.mxu0 %v1382
        %1487 = vmatmul.mubr.f32.gmra.mrb[0].mxu0 %v1381
        %v1488 = vpop.f32.mrb[0].mxu0
        %v1489 = vadd.f32 %v1405, %v1488
        %v1490 = vpop.f32.mrb[0].mxu0
        %1491 = vdwg.mxu0
        %1492 = vst [vmem:[%s355] sm:$0xff] %v1474
        %1493 = vst [vmem:[%s355 + $0x8] sm:$0xff] %v1479
        %1494 = vst [vmem:[%s355 + $0x10] sm:$0xff] %v1484
        %1495 = vst [vmem:[%s355 + $0x18] sm:$0xff] %v1489
        %s1496 = sand.u32 %s203, 1
        %s1497 = scalar_lea.sflag [#allocation3], %s1496
        %s1498 = sand.u32 %s203, 1
        %s1499 = smul.addr %s1498, 32
        %s1500 = scalar_lea.vmem [#allocation2], %s1499
        %s1501 = sand.u32 %s27, 1
        %s1502 = scalar_lea.sflag [#allocation5], %s1501
        %s1503 = sand.u32 %s231, 1
        %s1504 = scalar_lea.vmem [#allocation4], %s1503
        %s1505 = sand.u32 %s27, 1
        %s1506 = scalar_lea.sflag [#allocation5], %s1505
        %s1507 = sand.u32 %s259, 1
        %s1508 = smul.addr %s1507, 8
        %s1509 = scalar_lea.vmem [#allocation6], %s1508
        // Predicated region
        $region49: #{tpu_custom_call.1} parent=47 // pred_check
          %p1510 = pneg %p213
        $region50: #{tpu_custom_call.1} parent=47 // pred_check_branch
          %1512 = sbr.rel (%p1510) target = $region52
        $region51: #{tpu_custom_call.1} parent=47 // pred_region
          %s1514 = ssub.s32 512, 512
          %1515 = vsyncadd %s1497, %s1514
          %s1516 = smul.addr %s31, 4
          %s1517 = sadd.s32 %s32, %s1516
          %s1518 = smul.addr %s1517, 128
          %s1519 = scalar_lea.hbm %s7, %s1518
          %s1520 = sshll.u32 %s1500, 4
          %s1521 = int_to_ptr.vmem [resolvable:$true] %s1520
          %1526 = dma.vmem_to_hbm [thread:$0]  %s1521, 512, %s1519, %s1497, 128, 128, 8
        $region52: #{tpu_custom_call.1} parent=47 // pred_fallthru
          _
        // Predicated region
        $region53: #{tpu_custom_call.1} parent=47 // pred_check
          %p1527 = pneg %p241
        $region54: #{tpu_custom_call.1} parent=47 // pred_check_branch
          %1529 = sbr.rel (%p1527) target = $region56
        $region55: #{tpu_custom_call.1} parent=47 // pred_region
          %s1531 = ssub.s32 16, 16
          %1532 = vsyncadd %s1502, %s1531
          %s1533 = sadd.s32 %s32, %s31
          %s1534 = smul.addr %s1533, 16
          %s1535 = scalar_lea.hbm %s8, %s1534
          %s1537 = sshll.u32 %s1504, 4
          %s1538 = int_to_ptr.vmem [resolvable:$true] %s1537
          %1540 = dma.vmem_to_hbm [thread:$0]  %s1538, 16, %s1535, %s1502
        $region56: #{tpu_custom_call.1} parent=47 // pred_fallthru
          _
        // Predicated region
        $region57: #{tpu_custom_call.1} parent=47 // pred_check
          %p1541 = pneg %p269
        $region58: #{tpu_custom_call.1} parent=47 // pred_check_branch
          %1543 = sbr.rel (%p1541) target = $region60
        $region59: #{tpu_custom_call.1} parent=47 // pred_region
          %s1545 = ssub.s32 128, 128
          %1546 = vsyncadd %s1506, %s1545
          %s1547 = sadd.s32 %s32, %s31
          %s1548 = smul.addr %s1547, 128
          %s1549 = scalar_lea.hbm %s9, %s1548
          %s1551 = sshll.u32 %s1509, 4
          %s1552 = int_to_ptr.vmem [resolvable:$true] %s1551
          %1554 = dma.vmem_to_hbm [thread:$0]  %s1552, 128, %s1549, %s1506
        $region60: #{tpu_custom_call.1} parent=47 // pred_fallthru
          _
      $region48: #{tpu_custom_call.1} parent=5 // pred_fallthru
        _
      %p1555 = scmp.le.s32.totalorder 2, %s22
      // Predicated region
      $region61: #{tpu_custom_call.1} parent=5 // pred_check
        %p1556 = pneg %p1555
      $region62: #{tpu_custom_call.1} parent=5 // pred_check_branch
        %1558 = sbr.rel (%p1556) target = $region64
      $region63: #{tpu_custom_call.1} parent=5 // pred_region
        %s1559 = ssub.s32 %s22, 2
        // Predicated region
        $region65: #{tpu_custom_call.1} parent=63 // pred_check
          %p1560 = pneg %p219
        $region66: #{tpu_custom_call.1} parent=63 // pred_check_branch
          %1562 = sbr.rel (%p1560) target = $region68
        $region67: #{tpu_custom_call.1} parent=63 // pred_region
          %s1563 = sand.u32 %s204, 1
          %s1564 = scalar_lea.sflag [#allocation3], %s1563
          %s1565 = sand.u32 %s204, 1
          %s1566 = smul.addr %s1565, 32
          %s1567 = scalar_lea.vmem [#allocation2], %s1566
          %1568 = dma.done %s1564, 512
        $region68: #{tpu_custom_call.1} parent=63 // pred_fallthru
          _
        // Predicated region
        $region69: #{tpu_custom_call.1} parent=63 // pred_check
          %p1569 = pneg %p247
        $region70: #{tpu_custom_call.1} parent=63 // pred_check_branch
          %1571 = sbr.rel (%p1569) target = $region72
        $region71: #{tpu_custom_call.1} parent=63 // pred_region
          %s1572 = sand.u32 %s28, 1
          %s1573 = scalar_lea.sflag [#allocation5], %s1572
          %s1574 = sand.u32 %s232, 1
          %s1575 = scalar_lea.vmem [#allocation4], %s1574
          %1576 = dma.done %s1573, 16
        $region72: #{tpu_custom_call.1} parent=63 // pred_fallthru
          _
        // Predicated region
        $region73: #{tpu_custom_call.1} parent=63 // pred_check
          %p1577 = pneg %p275
        $region74: #{tpu_custom_call.1} parent=63 // pred_check_branch
          %1579 = sbr.rel (%p1577) target = $region76
        $region75: #{tpu_custom_call.1} parent=63 // pred_region
          %s1580 = sand.u32 %s28, 1
          %s1581 = scalar_lea.sflag [#allocation5], %s1580
          %s1582 = sand.u32 %s260, 1
          %s1583 = smul.addr %s1582, 8
          %s1584 = scalar_lea.vmem [#allocation6], %s1583
          %1585 = dma.done %s1581, 128
        $region76: #{tpu_custom_call.1} parent=63 // pred_fallthru
          _
      $region64: #{tpu_custom_call.1} parent=5 // pred_fallthru
        _
    $region6: #{tpu_custom_call.1} parent=1 // loop_footer
      %s26 = sadd.s32 1, %s22
    $region7: #{tpu_custom_call.1} parent=1 // loop_footer_branch
      %21 = sbr.rel target = $region3
    $region8: #{tpu_custom_call.1} parent=1 // loop_exit
      _
    %1586 = vsyncpa [#allocation3], 1
    %s1587 = scalar_lea.sflag [#allocation3], 1
    %1588 = vsyncpa %s1587, 1
    %1589 = vsyncpa [#allocation5], 1
    %s1590 = scalar_lea.sflag [#allocation5], 1
    %1591 = vsyncpa %s1590, 1

</llo_original>
